<compile_context>
chip_gen: v7x
topology: tpu7x:2x2x1
jax: 0.10.0
libtpu: 0.0.40
codegen_flags: <defaults>
</compile_context>

<pallas_src>
import jax
import jax.numpy as jnp
from jax.experimental import pallas as pl
from jax.experimental.pallas import tpu as pltpu


def neucf_kernel(gmf_u_ref, gmf_item_ref,            # GMF embeddings (item incl. metadata sum)
                 mlp_u_ref, mlp_i_ref, mlp_m_ref,    # MLP embeddings (metadata flattened)
                 w1u_ref, w1i_ref, w1m_ref, b1_ref,  # linear_1 split by input block
                 w2_ref, b2_ref, w3_ref, b3_ref,     # linear_2 / linear_3
                 w4g_ref, w4m_ref, b4_ref,           # linear_4 split + lane-padded
                 out_ref):
    acc_t = jnp.float32

    def mm(x, w_ref):
        w = w_ref[...]
        # bf16 (or f32) MXU matmul with f32 accumulation.
        return jnp.dot(x.astype(w.dtype), w, preferred_element_type=acc_t)

    # ---- GMF path (f32 elementwise; metadata sum already folded in wrapper) ----
    gmf = gmf_u_ref[...] * gmf_item_ref[...]                       # (TB, F) f32

    # ---- MLP path: concat-free split-weight matmuls ----
    h = (mm(mlp_u_ref[...], w1u_ref)
         + mm(mlp_i_ref[...], w1i_ref)
         + mm(mlp_m_ref[...], w1m_ref)
         + b1_ref[...])                                            # (TB, 4F)
    h = jnp.maximum(h, 0.0)
    h = jnp.maximum(mm(h, w2_ref) + b2_ref[...], 0.0)              # (TB, 2F)
    mlp = mm(h, w3_ref) + b3_ref[...]                              # (TB, F)

    # ---- Fusion + final linear: split w4, lane-dense (TB, 128) output ----
    out_ref[...] = mm(gmf, w4g_ref) + mm(mlp, w4m_ref) + b4_ref[...]


def neucf_forward(params, user_id, item_id, metadata_id, *,
                  tb=256,                      # batch tile: 256 on v6e/v7x, 128 on v5e
                  matmul_dtype=jnp.bfloat16):  # MXU dtype; use jnp.float32 to disable cast
    B = user_id.shape[0]
    F = params["user_gmf"].shape[1]
    T = metadata_id.shape[1]
    OUT_LANES = 128

    # ---- Pad batch to a multiple of the tile (id 0 is a valid row; padded
    #      output rows are sliced off below). ----
    n_blocks = pl.cdiv(B, tb)
    B_pad = n_blocks * tb
    pad = B_pad - B
    uid = jnp.pad(user_id, (0, pad))
    iid = jnp.pad(item_id, (0, pad))
    mid = jnp.pad(metadata_id, ((0, pad), (0, 0)))

    # ---- Embedding gathers (data-dependent) in XLA glue; the GMF metadata
    #      reduction is fused into the gather epilogue here. ----
    gmf_u = jnp.take(params["user_gmf"], uid, axis=0)                       # (Bp, F)
    gmf_item = (jnp.take(params["item_gmf"], iid, axis=0)
                + jnp.take(params["metadata_gmf"], mid, axis=0).sum(axis=1))  # (Bp, F)
    mlp_u = jnp.take(params["user_mlp"], uid, axis=0)                       # (Bp, F)
    mlp_i = jnp.take(params["item_mlp"], iid, axis=0)                       # (Bp, F)
    mlp_m = jnp.take(params["metadata_mlp"], mid, axis=0).reshape(B_pad, T * F)
    # TODO(synk): fuse the gathers into the kernel (scalar-prefetched ids +
    # in-kernel table lookup) to remove the HBM round trip of gathered rows.

    # ---- Split / cast weights for concat-free matmuls ----
    w1 = params["w1"].astype(matmul_dtype)                 # (in_dim, 4F)
    w1u, w1i, w1m = w1[:F], w1[F:2 * F], w1[2 * F:]
    w2 = params["w2"].astype(matmul_dtype)                 # (4F, 2F)
    w3 = params["w3"].astype(matmul_dtype)                 # (2F, F)
    # Lane-dense final projection: real score lives in output lane 0.
    w4_pad = jnp.zeros((2 * F, OUT_LANES), jnp.float32).at[:, 0].set(params["w4"][:, 0])
    w4g = w4_pad[:F].astype(matmul_dtype)
    w4m = w4_pad[F:].astype(matmul_dtype)
    b4_pad = jnp.zeros((1, OUT_LANES), jnp.float32).at[:, 0].set(params["b4"][:, 0])

    # ---- Specs ----
    def batch_spec(cols):
        return pl.BlockSpec((tb, cols), lambda i: (i, 0))

    def resident(shape):  # whole array, same block every step -> stays in VMEM
        return pl.BlockSpec(shape, lambda i: (0, 0))

    in_dim = F * (2 + T)
    flops_per_row = 2 * (in_dim * 4 * F + 4 * F * 2 * F + 2 * F * F + 2 * F * OUT_LANES)
    act_bytes_per_row = 4 * (4 * F + T * F) + 4 * OUT_LANES
    weight_bytes = (w1.size + w2.size + w3.size + w4g.size + w4m.size) * w1.dtype.itemsize \
                   + 4 * (4 * F + 2 * F + F + OUT_LANES)
    cost = pl.CostEstimate(flops=flops_per_row * B_pad,
                           transcendentals=0,
                           bytes_accessed=act_bytes_per_row * B_pad + weight_bytes)

    out = pl.pallas_call(
        neucf_kernel,
        out_shape=jax.ShapeDtypeStruct((B_pad, OUT_LANES), jnp.float32),
        grid_spec=pltpu.PrefetchScalarGridSpec(
            num_scalar_prefetch=0,
            grid=(n_blocks,),
            in_specs=[
                batch_spec(F), batch_spec(F),                 # gmf_u, gmf_item
                batch_spec(F), batch_spec(F), batch_spec(T * F),  # mlp_u, mlp_i, mlp_m
                resident((F, 4 * F)), resident((F, 4 * F)),
                resident((T * F, 4 * F)), resident((1, 4 * F)),
                resident((4 * F, 2 * F)), resident((1, 2 * F)),
                resident((2 * F, F)), resident((1, F)),
                resident((F, OUT_LANES)), resident((F, OUT_LANES)),
                resident((1, OUT_LANES)),
            ],
            out_specs=pl.BlockSpec((tb, OUT_LANES), lambda i: (i, 0)),
        ),
        compiler_params=pltpu.CompilerParams(
            dimension_semantics=("parallel",),
            vmem_limit_bytes=32 * 1024 * 1024,
        ),
        cost_estimate=cost,
    )(
        gmf_u, gmf_item, mlp_u, mlp_i, mlp_m,
        w1u, w1i, w1m, params["b1"],
        w2, params["b2"],
        w3, params["b3"],
        w4g, w4m, b4_pad,
    )
    return out[:B, :1]


def init_params(key, n_users, n_items, n_metadata, n_metadata_type, n_factors):
    """Deterministic synthetic init mirroring NeuCF.__init__ shapes."""
    F = n_factors
    T = n_metadata_type
    in_dim = F * (2 + T)
    ks = jax.random.split(key, 15)
    scale = 1.0 / F  # ScaledEmbedding-style scaling

    def emb(k, n):
        return jax.random.normal(k, (n, F), jnp.float32) * scale

    return {
        "metadata_gmf": emb(ks[0], n_metadata),
        "metadata_mlp": emb(ks[1], n_metadata),
        "user_gmf": emb(ks[2], n_users),
        "user_mlp": emb(ks[3], n_users),
        "item_gmf": emb(ks[4], n_items),
        "item_mlp": emb(ks[5], n_items),
        # Linear layers stored (in_features, out_features)
        "w1": jax.random.normal(ks[6], (in_dim, 4 * F), jnp.float32) * 0.05,
        "b1": jax.random.normal(ks[7], (1, 4 * F), jnp.float32) * 0.01,
        "w2": jax.random.normal(ks[8], (4 * F, 2 * F), jnp.float32) * 0.05,
        "b2": jax.random.normal(ks[9], (1, 2 * F), jnp.float32) * 0.01,
        "w3": jax.random.normal(ks[10], (2 * F, F), jnp.float32) * 0.05,
        "b3": jax.random.normal(ks[11], (1, F), jnp.float32) * 0.01,
        "w4": jax.random.normal(ks[12], (2 * F, 1), jnp.float32) * 0.05,
        "b4": jax.random.normal(ks[13], (1, 1), jnp.float32) * 0.01,
        # self.weights parameter exists in the module but is unused in forward
        "weights": jax.random.uniform(ks[14], (2,), jnp.float32),
    }


def reference_forward(params, user_id, item_id, metadata_id):
    """Pure-JAX (f32) reference replicating the PyTorch forward semantics."""
    B = user_id.shape[0]
    F = params["user_gmf"].shape[1]
    T = metadata_id.shape[1]

    # GMF
    u = jnp.take(params["user_gmf"], user_id, axis=0)
    i = jnp.take(params["item_gmf"], item_id, axis=0)
    m = jnp.take(params["metadata_gmf"], metadata_id, axis=0)
    item_meta = jnp.concatenate([i.reshape(B, 1, F), m], axis=1)
    gmf = u * item_meta.sum(axis=1)

    # MLP
    u2 = jnp.take(params["user_mlp"], user_id, axis=0)
    i2 = jnp.take(params["item_mlp"], item_id, axis=0)
    m2 = jnp.take(params["metadata_mlp"], metadata_id, axis=0).reshape(B, T * F)
    cat = jnp.concatenate([u2, i2, m2], axis=1)
    h = jax.nn.relu(cat @ params["w1"] + params["b1"])
    h = jax.nn.relu(h @ params["w2"] + params["b2"])
    mlp = h @ params["w3"] + params["b3"]

    fused = jnp.concatenate([gmf, mlp], axis=1)
    return fused @ params["w4"] + params["b4"]


if __name__ == "__main__":
    # Small, deterministic synthetic problem (batch > TB exercises grid + padding)
    n_users, n_items = 50, 40
    n_metadata = 20          # total metadata vocabulary size
    n_metadata_type = 2      # T: number of metadata columns
    n_factors = 32           # F
    batch = 300              # B (padded to 512 -> 2 grid steps at TB=256)

    key = jax.random.PRNGKey(0)
    kp, ku, ki, km = jax.random.split(key, 4)

    params = init_params(kp, n_users, n_items, n_metadata, n_metadata_type, n_factors)

    user_id = jax.random.randint(ku, (batch,), 0, n_users, dtype=jnp.int32)
    item_id = jax.random.randint(ki, (batch,), 0, n_items, dtype=jnp.int32)
    metadata_id = jax.random.randint(km, (batch, n_metadata_type), 0, n_metadata,
                                     dtype=jnp.int32)

    fwd = jax.jit(neucf_forward)
    out = jax.block_until_ready(fwd(params, user_id, item_id, metadata_id))

    ref = reference_forward(params, user_id, item_id, metadata_id)
    assert out.shape == (batch, 1), out.shape
    max_err = float(jnp.max(jnp.abs(out - ref)))
    # bf16 matmuls with f32 accumulation -> relaxed (but still tight) tolerance.
    assert jnp.allclose(out, ref, atol=5e-3, rtol=5e-2), max_err

    print("KERNEL_OK")
</pallas_src>

<mosaic_0001>
module attributes {stable_mosaic.version = 11 : i64} {
  func.func @neucf_kernel(%arg0: i32, %arg1: memref<256x32xf32, #tpu.memory_space<vmem>>, %arg2: memref<256x32xf32, #tpu.memory_space<vmem>>, %arg3: memref<256x32xf32, #tpu.memory_space<vmem>>, %arg4: memref<256x32xf32, #tpu.memory_space<vmem>>, %arg5: memref<256x64xf32, #tpu.memory_space<vmem>>, %arg6: memref<32x128xbf16, #tpu.memory_space<vmem>>, %arg7: memref<32x128xbf16, #tpu.memory_space<vmem>>, %arg8: memref<64x128xbf16, #tpu.memory_space<vmem>>, %arg9: memref<1x128xf32, #tpu.memory_space<vmem>>, %arg10: memref<128x64xbf16, #tpu.memory_space<vmem>>, %arg11: memref<1x64xf32, #tpu.memory_space<vmem>>, %arg12: memref<64x32xbf16, #tpu.memory_space<vmem>>, %arg13: memref<1x32xf32, #tpu.memory_space<vmem>>, %arg14: memref<32x128xbf16, #tpu.memory_space<vmem>>, %arg15: memref<32x128xbf16, #tpu.memory_space<vmem>>, %arg16: memref<1x128xf32, #tpu.memory_space<vmem>>, %arg17: memref<256x128xf32, #tpu.memory_space<vmem>>) attributes {dimension_semantics = [#tpu.dimension_semantics<parallel>], iteration_bounds = array<i64: 2>, scalar_prefetch = 0 : i64, scratch_operands = 0 : i64, tpu.core_type = #tpu.core_type<tc>, window_params = [{transform_indices = @transform_0, window_bounds = array<i64: 256, 32>}, {transform_indices = @transform_1, window_bounds = array<i64: 256, 32>}, {transform_indices = @transform_2, window_bounds = array<i64: 256, 32>}, {transform_indices = @transform_3, window_bounds = array<i64: 256, 32>}, {transform_indices = @transform_4, window_bounds = array<i64: 256, 64>}, {pipeline_mode = #tpu.pipeline_mode<synchronous>, transform_indices = @transform_5, window_bounds = array<i64: 32, 128>}, {pipeline_mode = #tpu.pipeline_mode<synchronous>, transform_indices = @transform_6, window_bounds = array<i64: 32, 128>}, {pipeline_mode = #tpu.pipeline_mode<synchronous>, transform_indices = @transform_7, window_bounds = array<i64: 64, 128>}, {pipeline_mode = #tpu.pipeline_mode<synchronous>, transform_indices = @transform_8, window_bounds = array<i64: 1, 128>}, {pipeline_mode = #tpu.pipeline_mode<synchronous>, transform_indices = @transform_9, window_bounds = array<i64: 128, 64>}, {pipeline_mode = #tpu.pipeline_mode<synchronous>, transform_indices = @transform_10, window_bounds = array<i64: 1, 64>}, {pipeline_mode = #tpu.pipeline_mode<synchronous>, transform_indices = @transform_11, window_bounds = array<i64: 64, 32>}, {pipeline_mode = #tpu.pipeline_mode<synchronous>, transform_indices = @transform_12, window_bounds = array<i64: 1, 32>}, {pipeline_mode = #tpu.pipeline_mode<synchronous>, transform_indices = @transform_13, window_bounds = array<i64: 32, 128>}, {pipeline_mode = #tpu.pipeline_mode<synchronous>, transform_indices = @transform_14, window_bounds = array<i64: 32, 128>}, {pipeline_mode = #tpu.pipeline_mode<synchronous>, transform_indices = @transform_15, window_bounds = array<i64: 1, 128>}, {transform_indices = @transform_16, window_bounds = array<i64: 256, 128>}]} {
    %c0 = arith.constant 0 : index
    %c0_0 = arith.constant 0 : index
    %0 = vector.load %arg1[%c0, %c0_0] : memref<256x32xf32, #tpu.memory_space<vmem>>, vector<256x32xf32>
    %c0_1 = arith.constant 0 : index
    %c0_2 = arith.constant 0 : index
    %1 = vector.load %arg2[%c0_1, %c0_2] : memref<256x32xf32, #tpu.memory_space<vmem>>, vector<256x32xf32>
    %2 = arith.mulf %0, %1 : vector<256x32xf32>
    %c0_3 = arith.constant 0 : index
    %c0_4 = arith.constant 0 : index
    %3 = vector.load %arg3[%c0_3, %c0_4] : memref<256x32xf32, #tpu.memory_space<vmem>>, vector<256x32xf32>
    %c0_5 = arith.constant 0 : index
    %c0_6 = arith.constant 0 : index
    %4 = vector.load %arg6[%c0_5, %c0_6] : memref<32x128xbf16, #tpu.memory_space<vmem>>, vector<32x128xbf16>
    %5 = arith.truncf %3 : vector<256x32xf32> to vector<256x32xbf16>
    %cst = arith.constant dense<0.000000e+00> : vector<256x128xf32>
    %6 = tpu.matmul %5, %4, %cst {dimension_numbers = #tpu.dot_dimension_numbers<[1], [0], [0], [1], [0, 0, 1, 1], [], []>} : vector<256x32xbf16>, vector<32x128xbf16>, vector<256x128xf32> -> vector<256x128xf32>
    %c0_7 = arith.constant 0 : index
    %c0_8 = arith.constant 0 : index
    %7 = vector.load %arg4[%c0_7, %c0_8] : memref<256x32xf32, #tpu.memory_space<vmem>>, vector<256x32xf32>
    %c0_9 = arith.constant 0 : index
    %c0_10 = arith.constant 0 : index
    %8 = vector.load %arg7[%c0_9, %c0_10] : memref<32x128xbf16, #tpu.memory_space<vmem>>, vector<32x128xbf16>
    %9 = arith.truncf %7 : vector<256x32xf32> to vector<256x32xbf16>
    %cst_11 = arith.constant dense<0.000000e+00> : vector<256x128xf32>
    %10 = tpu.matmul %9, %8, %cst_11 {dimension_numbers = #tpu.dot_dimension_numbers<[1], [0], [0], [1], [0, 0, 1, 1], [], []>} : vector<256x32xbf16>, vector<32x128xbf16>, vector<256x128xf32> -> vector<256x128xf32>
    %11 = arith.addf %6, %10 : vector<256x128xf32>
    %c0_12 = arith.constant 0 : index
    %c0_13 = arith.constant 0 : index
    %12 = vector.load %arg5[%c0_12, %c0_13] : memref<256x64xf32, #tpu.memory_space<vmem>>, vector<256x64xf32>
    %c0_14 = arith.constant 0 : index
    %c0_15 = arith.constant 0 : index
    %13 = vector.load %arg8[%c0_14, %c0_15] : memref<64x128xbf16, #tpu.memory_space<vmem>>, vector<64x128xbf16>
    %14 = arith.truncf %12 : vector<256x64xf32> to vector<256x64xbf16>
    %cst_16 = arith.constant dense<0.000000e+00> : vector<256x128xf32>
    %15 = tpu.matmul %14, %13, %cst_16 {dimension_numbers = #tpu.dot_dimension_numbers<[1], [0], [0], [1], [0, 0, 1, 1], [], []>} : vector<256x64xbf16>, vector<64x128xbf16>, vector<256x128xf32> -> vector<256x128xf32>
    %16 = arith.addf %11, %15 : vector<256x128xf32>
    %c0_17 = arith.constant 0 : index
    %c0_18 = arith.constant 0 : index
    %17 = vector.load %arg9[%c0_17, %c0_18] : memref<1x128xf32, #tpu.memory_space<vmem>>, vector<1x128xf32>
    %18 = vector.broadcast %17 : vector<1x128xf32> to vector<256x128xf32>
    %19 = arith.addf %16, %18 : vector<256x128xf32>
    %cst_19 = arith.constant 0.000000e+00 : f32
    %20 = vector.broadcast %cst_19 : f32 to vector<256x128xf32>
    %21 = arith.maximumf %19, %20 : vector<256x128xf32>
    %c0_20 = arith.constant 0 : index
    %c0_21 = arith.constant 0 : index
    %22 = vector.load %arg10[%c0_20, %c0_21] : memref<128x64xbf16, #tpu.memory_space<vmem>>, vector<128x64xbf16>
    %23 = arith.truncf %21 : vector<256x128xf32> to vector<256x128xbf16>
    %cst_22 = arith.constant dense<0.000000e+00> : vector<256x64xf32>
    %24 = tpu.matmul %23, %22, %cst_22 {dimension_numbers = #tpu.dot_dimension_numbers<[1], [0], [0], [1], [0, 0, 1, 1], [], []>} : vector<256x128xbf16>, vector<128x64xbf16>, vector<256x64xf32> -> vector<256x64xf32>
    %c0_23 = arith.constant 0 : index
    %c0_24 = arith.constant 0 : index
    %25 = vector.load %arg11[%c0_23, %c0_24] : memref<1x64xf32, #tpu.memory_space<vmem>>, vector<1x64xf32>
    %26 = vector.broadcast %25 : vector<1x64xf32> to vector<256x64xf32>
    %27 = arith.addf %24, %26 : vector<256x64xf32>
    %cst_25 = arith.constant 0.000000e+00 : f32
    %28 = vector.broadcast %cst_25 : f32 to vector<256x64xf32>
    %29 = arith.maximumf %27, %28 : vector<256x64xf32>
    %c0_26 = arith.constant 0 : index
    %c0_27 = arith.constant 0 : index
    %30 = vector.load %arg12[%c0_26, %c0_27] : memref<64x32xbf16, #tpu.memory_space<vmem>>, vector<64x32xbf16>
    %31 = arith.truncf %29 : vector<256x64xf32> to vector<256x64xbf16>
    %cst_28 = arith.constant dense<0.000000e+00> : vector<256x32xf32>
    %32 = tpu.matmul %31, %30, %cst_28 {dimension_numbers = #tpu.dot_dimension_numbers<[1], [0], [0], [1], [0, 0, 1, 1], [], []>} : vector<256x64xbf16>, vector<64x32xbf16>, vector<256x32xf32> -> vector<256x32xf32>
    %c0_29 = arith.constant 0 : index
    %c0_30 = arith.constant 0 : index
    %33 = vector.load %arg13[%c0_29, %c0_30] : memref<1x32xf32, #tpu.memory_space<vmem>>, vector<1x32xf32>
    %34 = vector.broadcast %33 : vector<1x32xf32> to vector<256x32xf32>
    %35 = arith.addf %32, %34 : vector<256x32xf32>
    %c0_31 = arith.constant 0 : index
    %c0_32 = arith.constant 0 : index
    %36 = vector.load %arg14[%c0_31, %c0_32] : memref<32x128xbf16, #tpu.memory_space<vmem>>, vector<32x128xbf16>
    %37 = arith.truncf %2 : vector<256x32xf32> to vector<256x32xbf16>
    %cst_33 = arith.constant dense<0.000000e+00> : vector<256x128xf32>
    %38 = tpu.matmul %37, %36, %cst_33 {dimension_numbers = #tpu.dot_dimension_numbers<[1], [0], [0], [1], [0, 0, 1, 1], [], []>} : vector<256x32xbf16>, vector<32x128xbf16>, vector<256x128xf32> -> vector<256x128xf32>
    %c0_34 = arith.constant 0 : index
    %c0_35 = arith.constant 0 : index
    %39 = vector.load %arg15[%c0_34, %c0_35] : memref<32x128xbf16, #tpu.memory_space<vmem>>, vector<32x128xbf16>
    %40 = arith.truncf %35 : vector<256x32xf32> to vector<256x32xbf16>
    %cst_36 = arith.constant dense<0.000000e+00> : vector<256x128xf32>
    %41 = tpu.matmul %40, %39, %cst_36 {dimension_numbers = #tpu.dot_dimension_numbers<[1], [0], [0], [1], [0, 0, 1, 1], [], []>} : vector<256x32xbf16>, vector<32x128xbf16>, vector<256x128xf32> -> vector<256x128xf32>
    %42 = arith.addf %38, %41 : vector<256x128xf32>
    %c0_37 = arith.constant 0 : index
    %c0_38 = arith.constant 0 : index
    %43 = vector.load %arg16[%c0_37, %c0_38] : memref<1x128xf32, #tpu.memory_space<vmem>>, vector<1x128xf32>
    %44 = vector.broadcast %43 : vector<1x128xf32> to vector<256x128xf32>
    %45 = arith.addf %42, %44 : vector<256x128xf32>
    %c0_39 = arith.constant 0 : index
    %c0_40 = arith.constant 0 : index
    %46 = vector.load %arg17[%c0_39, %c0_40] : memref<256x128xf32, #tpu.memory_space<vmem>>, vector<256x128xf32>
    tpu.vector_store %arg17[%c0_39, %c0_40], %45 {strides = array<i32>} : memref<256x128xf32, #tpu.memory_space<vmem>>, vector<256x128xf32>,
    return
  }
  func.func @transform_0(%arg0: i32) -> (i32, i32) {
    %c0_i32 = arith.constant 0 : i32
    %c0_i32_0 = arith.constant 0 : i32
    return %arg0, %c0_i32 : i32, i32
  }
  func.func @transform_1(%arg0: i32) -> (i32, i32) {
    %c0_i32 = arith.constant 0 : i32
    %c0_i32_0 = arith.constant 0 : i32
    return %arg0, %c0_i32 : i32, i32
  }
  func.func @transform_2(%arg0: i32) -> (i32, i32) {
    %c0_i32 = arith.constant 0 : i32
    %c0_i32_0 = arith.constant 0 : i32
    return %arg0, %c0_i32 : i32, i32
  }
  func.func @transform_3(%arg0: i32) -> (i32, i32) {
    %c0_i32 = arith.constant 0 : i32
    %c0_i32_0 = arith.constant 0 : i32
    return %arg0, %c0_i32 : i32, i32
  }
  func.func @transform_4(%arg0: i32) -> (i32, i32) {
    %c0_i32 = arith.constant 0 : i32
    %c0_i32_0 = arith.constant 0 : i32
    return %arg0, %c0_i32 : i32, i32
  }
  func.func @transform_5(%arg0: i32) -> (i32, i32) {
    %c0_i32 = arith.constant 0 : i32
    %c0_i32_0 = arith.constant 0 : i32
    %c0_i32_1 = arith.constant 0 : i32
    return %c0_i32, %c0_i32_0 : i32, i32
  }
  func.func @transform_6(%arg0: i32) -> (i32, i32) {
    %c0_i32 = arith.constant 0 : i32
    %c0_i32_0 = arith.constant 0 : i32
    %c0_i32_1 = arith.constant 0 : i32
    return %c0_i32, %c0_i32_0 : i32, i32
  }
  func.func @transform_7(%arg0: i32) -> (i32, i32) {
    %c0_i32 = arith.constant 0 : i32
    %c0_i32_0 = arith.constant 0 : i32
    %c0_i32_1 = arith.constant 0 : i32
    return %c0_i32, %c0_i32_0 : i32, i32
  }
  func.func @transform_8(%arg0: i32) -> (i32, i32) {
    %c0_i32 = arith.constant 0 : i32
    %c0_i32_0 = arith.constant 0 : i32
    %c0_i32_1 = arith.constant 0 : i32
    return %c0_i32, %c0_i32_0 : i32, i32
  }
  func.func @transform_9(%arg0: i32) -> (i32, i32) {
    %c0_i32 = arith.constant 0 : i32
    %c0_i32_0 = arith.constant 0 : i32
    %c0_i32_1 = arith.constant 0 : i32
    return %c0_i32, %c0_i32_0 : i32, i32
  }
  func.func @transform_10(%arg0: i32) -> (i32, i32) {
    %c0_i32 = arith.constant 0 : i32
    %c0_i32_0 = arith.constant 0 : i32
    %c0_i32_1 = arith.constant 0 : i32
    return %c0_i32, %c0_i32_0 : i32, i32
  }
  func.func @transform_11(%arg0: i32) -> (i32, i32) {
    %c0_i32 = arith.constant 0 : i32
    %c0_i32_0 = arith.constant 0 : i32
    %c0_i32_1 = arith.constant 0 : i32
    return %c0_i32, %c0_i32_0 : i32, i32
  }
  func.func @transform_12(%arg0: i32) -> (i32, i32) {
    %c0_i32 = arith.constant 0 : i32
    %c0_i32_0 = arith.constant 0 : i32
    %c0_i32_1 = arith.constant 0 : i32
    return %c0_i32, %c0_i32_0 : i32, i32
  }
  func.func @transform_13(%arg0: i32) -> (i32, i32) {
    %c0_i32 = arith.constant 0 : i32
    %c0_i32_0 = arith.constant 0 : i32
    %c0_i32_1 = arith.constant 0 : i32
    return %c0_i32, %c0_i32_0 : i32, i32
  }
  func.func @transform_14(%arg0: i32) -> (i32, i32) {
    %c0_i32 = arith.constant 0 : i32
    %c0_i32_0 = arith.constant 0 : i32
    %c0_i32_1 = arith.constant 0 : i32
    return %c0_i32, %c0_i32_0 : i32, i32
  }
  func.func @transform_15(%arg0: i32) -> (i32, i32) {
    %c0_i32 = arith.constant 0 : i32
    %c0_i32_0 = arith.constant 0 : i32
    %c0_i32_1 = arith.constant 0 : i32
    return %c0_i32, %c0_i32_0 : i32, i32
  }
  func.func @transform_16(%arg0: i32) -> (i32, i32) {
    %c0_i32 = arith.constant 0 : i32
    %c0_i32_0 = arith.constant 0 : i32
    return %arg0, %c0_i32 : i32, i32
  }
}

</mosaic_0001>

<llo_original>
// kernel: neucf_forward.1
$region0: #{neucf_forward.1}
  #allocation0 [shape = 'u32[]', space=smem, size = 0x4, offset = 0x4, fixed_abs, tag = 'smem constant byte address 0x4 - core index']
  #allocation1 [shape = 'u32[144,128]{1,0:T(1,128)}', space=vmem, size = 0x12000, scoped, tag = 'internal scratch']
  %s0 = inlined_call_operand.vmem [shape: f32[512,32], index: 0, kind: input, shape index: {}]
  %s1 = inlined_call_operand.vmem [shape: f32[512,32], index: 1, kind: input, shape index: {}]
  %s2 = inlined_call_operand.vmem [shape: f32[512,32], index: 2, kind: input, shape index: {}]
  %s3 = inlined_call_operand.vmem [shape: f32[512,32], index: 3, kind: input, shape index: {}]
  %s4 = inlined_call_operand.vmem [shape: f32[512,64], index: 4, kind: input, shape index: {}]
  %s5 = inlined_call_operand.vmem [shape: bf16[32,128], index: 5, kind: input, shape index: {}]
  %s6 = inlined_call_operand.vmem [shape: bf16[32,128], index: 6, kind: input, shape index: {}]
  %s7 = inlined_call_operand.vmem [shape: bf16[64,128], index: 7, kind: input, shape index: {}]
  %s8 = inlined_call_operand.vmem [shape: f32[1,128], index: 8, kind: input, shape index: {}]
  %s9 = inlined_call_operand.vmem [shape: bf16[128,64], index: 9, kind: input, shape index: {}]
  %s10 = inlined_call_operand.vmem [shape: f32[1,64], index: 10, kind: input, shape index: {}]
  %s11 = inlined_call_operand.vmem [shape: bf16[64,32], index: 11, kind: input, shape index: {}]
  %s12 = inlined_call_operand.vmem [shape: f32[1,32], index: 12, kind: input, shape index: {}]
  %s13 = inlined_call_operand.vmem [shape: bf16[32,128], index: 13, kind: input, shape index: {}]
  %s14 = inlined_call_operand.vmem [shape: bf16[32,128], index: 14, kind: input, shape index: {}]
  %s15 = inlined_call_operand.vmem [shape: f32[1,128], index: 15, kind: input, shape index: {}]
  %s16 = inlined_call_operand.vmem [shape: f32[512,128], index: 16, kind: output, shape index: {}]
  %s17 = sld [smem:[#allocation0]]
  $region97: #{neucf_forward.1} parent=0
    _
  %s19 = ssub.s32 1, %s17
  %s20 = scalar_select 0, %s19, %s17
  loop: start=0, step=1, limit=4
  $region2: #{neucf_forward.1} parent=0 // loop_pre_header
    _
  $region3: #{neucf_forward.1} parent=0 // loop_header
    %s22 = sphi 0, %s26
    %p23 = scmp.ge.s32.totalorder %s22, 4
    %s32 = sphi 0, %s34
    %s35 = sphi 0, %s32
    %s36 = sphi 0, %s35
    %s52 = sphi 0, %s36
    %s58 = sphi 0, %s60
    %s61 = sphi 0, %s58
    %s62 = sphi 0, %s61
    %s78 = sphi 0, %s62
    %s84 = sphi 0, %s86
    %s87 = sphi 0, %s84
    %s88 = sphi 0, %s87
    %s104 = sphi 0, %s88
    %s110 = sphi 0, %s112
    %s113 = sphi 0, %s110
    %s114 = sphi 0, %s113
    %s130 = sphi 0, %s114
    %s136 = sphi 0, %s138
    %s139 = sphi 0, %s136
    %s140 = sphi 0, %s139
    %s156 = sphi 0, %s140
    %s160 = sphi 0, %s160
    %s162 = sphi 0, %s160
    %s163 = sphi 0, %s162
    %s177 = sphi 0, %s163
    %s181 = sphi 0, %s181
    %s183 = sphi 0, %s181
    %s184 = sphi 0, %s183
    %s198 = sphi 0, %s184
    %s202 = sphi 0, %s202
    %s204 = sphi 0, %s202
    %s205 = sphi 0, %s204
    %s219 = sphi 0, %s205
    %s223 = sphi 0, %s223
    %s225 = sphi 0, %s223
    %s226 = sphi 0, %s225
    %s240 = sphi 0, %s226
    %s244 = sphi 0, %s244
    %s246 = sphi 0, %s244
    %s247 = sphi 0, %s246
    %s261 = sphi 0, %s247
    %s265 = sphi 0, %s265
    %s267 = sphi 0, %s265
    %s268 = sphi 0, %s267
    %s282 = sphi 0, %s268
    %s286 = sphi 0, %s286
    %s288 = sphi 0, %s286
    %s289 = sphi 0, %s288
    %s303 = sphi 0, %s289
    %s307 = sphi 0, %s307
    %s309 = sphi 0, %s307
    %s310 = sphi 0, %s309
    %s324 = sphi 0, %s310
    %s328 = sphi 0, %s328
    %s330 = sphi 0, %s328
    %s331 = sphi 0, %s330
    %s345 = sphi 0, %s331
    %s349 = sphi 0, %s349
    %s351 = sphi 0, %s349
    %s352 = sphi 0, %s351
    %s366 = sphi 0, %s352
    %s370 = sphi 0, %s370
    %s372 = sphi 0, %s370
    %s373 = sphi 0, %s372
    %s387 = sphi 0, %s373
    %s393 = sphi 0, %s395
    %s396 = sphi 0, %s393
    %s397 = sphi 0, %s396
    %s413 = sphi 0, %s397
  $region4: #{neucf_forward.1} parent=0 // loop_header_branch
    %25 = sbr.rel (%p23) target = $region8
  $region5: #{neucf_forward.1} parent=0 // loop_body
    %s27 = ssub.s32 %s22, 1
    %s28 = ssub.s32 %s22, 2
    %s29 = sadd.s32 %s22, 1
    %s30 = ssub.s32 %s22, %s29
    %p31 = scmp.eq.s32.totalorder %s30, 0
    %s33 = sadd.s32 %s32, 1
    %s34 = scalar_select %p31, %s32, %s33
    %p37 = pneg %p31
    %p38 = scmp.eq.s32.totalorder %s22, 1
    %p39 = por %p37, %p38
    %p40 = scmp.ne.s32.totalorder %s32, %s35
    %p41 = scmp.eq.s32.totalorder %s22, 0
    %p42 = por %p40, %p41
    %p43 = scmp.ne.s32.totalorder %s32, %s35
    %p44 = scmp.eq.s32.totalorder %s27, 1
    %p45 = por %p43, %p44
    %p46 = scmp.ne.s32.totalorder %s35, %s36
    %p47 = scmp.eq.s32.totalorder %s27, 0
    %p48 = por %p46, %p47
    %p49 = scmp.ne.s32.totalorder %s35, %s36
    %p50 = scmp.eq.s32.totalorder %s28, 1
    %p51 = por %p49, %p50
    %p53 = scmp.ne.s32.totalorder %s36, %s52
    %p54 = scmp.eq.s32.totalorder %s28, 0
    %p55 = por %p53, %p54
    %s56 = ssub.s32 %s22, %s29
    %p57 = scmp.eq.s32.totalorder %s56, 0
    %s59 = sadd.s32 %s58, 1
    %s60 = scalar_select %p57, %s58, %s59
    %p63 = pneg %p57
    %p64 = scmp.eq.s32.totalorder %s22, 1
    %p65 = por %p63, %p64
    %p66 = scmp.ne.s32.totalorder %s58, %s61
    %p67 = scmp.eq.s32.totalorder %s22, 0
    %p68 = por %p66, %p67
    %p69 = scmp.ne.s32.totalorder %s58, %s61
    %p70 = scmp.eq.s32.totalorder %s27, 1
    %p71 = por %p69, %p70
    %p72 = scmp.ne.s32.totalorder %s61, %s62
    %p73 = scmp.eq.s32.totalorder %s27, 0
    %p74 = por %p72, %p73
    %p75 = scmp.ne.s32.totalorder %s61, %s62
    %p76 = scmp.eq.s32.totalorder %s28, 1
    %p77 = por %p75, %p76
    %p79 = scmp.ne.s32.totalorder %s62, %s78
    %p80 = scmp.eq.s32.totalorder %s28, 0
    %p81 = por %p79, %p80
    %s82 = ssub.s32 %s22, %s29
    %p83 = scmp.eq.s32.totalorder %s82, 0
    %s85 = sadd.s32 %s84, 1
    %s86 = scalar_select %p83, %s84, %s85
    %p89 = pneg %p83
    %p90 = scmp.eq.s32.totalorder %s22, 1
    %p91 = por %p89, %p90
    %p92 = scmp.ne.s32.totalorder %s84, %s87
    %p93 = scmp.eq.s32.totalorder %s22, 0
    %p94 = por %p92, %p93
    %p95 = scmp.ne.s32.totalorder %s84, %s87
    %p96 = scmp.eq.s32.totalorder %s27, 1
    %p97 = por %p95, %p96
    %p98 = scmp.ne.s32.totalorder %s87, %s88
    %p99 = scmp.eq.s32.totalorder %s27, 0
    %p100 = por %p98, %p99
    %p101 = scmp.ne.s32.totalorder %s87, %s88
    %p102 = scmp.eq.s32.totalorder %s28, 1
    %p103 = por %p101, %p102
    %p105 = scmp.ne.s32.totalorder %s88, %s104
    %p106 = scmp.eq.s32.totalorder %s28, 0
    %p107 = por %p105, %p106
    %s108 = ssub.s32 %s22, %s29
    %p109 = scmp.eq.s32.totalorder %s108, 0
    %s111 = sadd.s32 %s110, 1
    %s112 = scalar_select %p109, %s110, %s111
    %p115 = pneg %p109
    %p116 = scmp.eq.s32.totalorder %s22, 1
    %p117 = por %p115, %p116
    %p118 = scmp.ne.s32.totalorder %s110, %s113
    %p119 = scmp.eq.s32.totalorder %s22, 0
    %p120 = por %p118, %p119
    %p121 = scmp.ne.s32.totalorder %s110, %s113
    %p122 = scmp.eq.s32.totalorder %s27, 1
    %p123 = por %p121, %p122
    %p124 = scmp.ne.s32.totalorder %s113, %s114
    %p125 = scmp.eq.s32.totalorder %s27, 0
    %p126 = por %p124, %p125
    %p127 = scmp.ne.s32.totalorder %s113, %s114
    %p128 = scmp.eq.s32.totalorder %s28, 1
    %p129 = por %p127, %p128
    %p131 = scmp.ne.s32.totalorder %s114, %s130
    %p132 = scmp.eq.s32.totalorder %s28, 0
    %p133 = por %p131, %p132
    %s134 = ssub.s32 %s22, %s29
    %p135 = scmp.eq.s32.totalorder %s134, 0
    %s137 = sadd.s32 %s136, 1
    %s138 = scalar_select %p135, %s136, %s137
    %p141 = pneg %p135
    %p142 = scmp.eq.s32.totalorder %s22, 1
    %p143 = por %p141, %p142
    %p144 = scmp.ne.s32.totalorder %s136, %s139
    %p145 = scmp.eq.s32.totalorder %s22, 0
    %p146 = por %p144, %p145
    %p147 = scmp.ne.s32.totalorder %s136, %s139
    %p148 = scmp.eq.s32.totalorder %s27, 1
    %p149 = por %p147, %p148
    %p150 = scmp.ne.s32.totalorder %s139, %s140
    %p151 = scmp.eq.s32.totalorder %s27, 0
    %p152 = por %p150, %p151
    %p153 = scmp.ne.s32.totalorder %s139, %s140
    %p154 = scmp.eq.s32.totalorder %s28, 1
    %p155 = por %p153, %p154
    %p157 = scmp.ne.s32.totalorder %s140, %s156
    %p158 = scmp.eq.s32.totalorder %s28, 0
    %p159 = por %p157, %p158
    %s161 = sadd.s32 %s160, 1
    %p164 = scmp.eq.s32.totalorder %s22, 1
    %p165 = scmp.ne.s32.totalorder %s160, %s162
    %p166 = scmp.eq.s32.totalorder %s22, 0
    %p167 = por %p165, %p166
    %p168 = scmp.ne.s32.totalorder %s160, %s162
    %p169 = scmp.eq.s32.totalorder %s27, 1
    %p170 = por %p168, %p169
    %p171 = scmp.ne.s32.totalorder %s162, %s163
    %p172 = scmp.eq.s32.totalorder %s27, 0
    %p173 = por %p171, %p172
    %p174 = scmp.ne.s32.totalorder %s162, %s163
    %p175 = scmp.eq.s32.totalorder %s28, 1
    %p176 = por %p174, %p175
    %p178 = scmp.ne.s32.totalorder %s163, %s177
    %p179 = scmp.eq.s32.totalorder %s28, 0
    %p180 = por %p178, %p179
    %s182 = sadd.s32 %s181, 1
    %p185 = scmp.eq.s32.totalorder %s22, 1
    %p186 = scmp.ne.s32.totalorder %s181, %s183
    %p187 = scmp.eq.s32.totalorder %s22, 0
    %p188 = por %p186, %p187
    %p189 = scmp.ne.s32.totalorder %s181, %s183
    %p190 = scmp.eq.s32.totalorder %s27, 1
    %p191 = por %p189, %p190
    %p192 = scmp.ne.s32.totalorder %s183, %s184
    %p193 = scmp.eq.s32.totalorder %s27, 0
    %p194 = por %p192, %p193
    %p195 = scmp.ne.s32.totalorder %s183, %s184
    %p196 = scmp.eq.s32.totalorder %s28, 1
    %p197 = por %p195, %p196
    %p199 = scmp.ne.s32.totalorder %s184, %s198
    %p200 = scmp.eq.s32.totalorder %s28, 0
    %p201 = por %p199, %p200
    %s203 = sadd.s32 %s202, 1
    %p206 = scmp.eq.s32.totalorder %s22, 1
    %p207 = scmp.ne.s32.totalorder %s202, %s204
    %p208 = scmp.eq.s32.totalorder %s22, 0
    %p209 = por %p207, %p208
    %p210 = scmp.ne.s32.totalorder %s202, %s204
    %p211 = scmp.eq.s32.totalorder %s27, 1
    %p212 = por %p210, %p211
    %p213 = scmp.ne.s32.totalorder %s204, %s205
    %p214 = scmp.eq.s32.totalorder %s27, 0
    %p215 = por %p213, %p214
    %p216 = scmp.ne.s32.totalorder %s204, %s205
    %p217 = scmp.eq.s32.totalorder %s28, 1
    %p218 = por %p216, %p217
    %p220 = scmp.ne.s32.totalorder %s205, %s219
    %p221 = scmp.eq.s32.totalorder %s28, 0
    %p222 = por %p220, %p221
    %s224 = sadd.s32 %s223, 1
    %p227 = scmp.eq.s32.totalorder %s22, 1
    %p228 = scmp.ne.s32.totalorder %s223, %s225
    %p229 = scmp.eq.s32.totalorder %s22, 0
    %p230 = por %p228, %p229
    %p231 = scmp.ne.s32.totalorder %s223, %s225
    %p232 = scmp.eq.s32.totalorder %s27, 1
    %p233 = por %p231, %p232
    %p234 = scmp.ne.s32.totalorder %s225, %s226
    %p235 = scmp.eq.s32.totalorder %s27, 0
    %p236 = por %p234, %p235
    %p237 = scmp.ne.s32.totalorder %s225, %s226
    %p238 = scmp.eq.s32.totalorder %s28, 1
    %p239 = por %p237, %p238
    %p241 = scmp.ne.s32.totalorder %s226, %s240
    %p242 = scmp.eq.s32.totalorder %s28, 0
    %p243 = por %p241, %p242
    %s245 = sadd.s32 %s244, 1
    %p248 = scmp.eq.s32.totalorder %s22, 1
    %p249 = scmp.ne.s32.totalorder %s244, %s246
    %p250 = scmp.eq.s32.totalorder %s22, 0
    %p251 = por %p249, %p250
    %p252 = scmp.ne.s32.totalorder %s244, %s246
    %p253 = scmp.eq.s32.totalorder %s27, 1
    %p254 = por %p252, %p253
    %p255 = scmp.ne.s32.totalorder %s246, %s247
    %p256 = scmp.eq.s32.totalorder %s27, 0
    %p257 = por %p255, %p256
    %p258 = scmp.ne.s32.totalorder %s246, %s247
    %p259 = scmp.eq.s32.totalorder %s28, 1
    %p260 = por %p258, %p259
    %p262 = scmp.ne.s32.totalorder %s247, %s261
    %p263 = scmp.eq.s32.totalorder %s28, 0
    %p264 = por %p262, %p263
    %s266 = sadd.s32 %s265, 1
    %p269 = scmp.eq.s32.totalorder %s22, 1
    %p270 = scmp.ne.s32.totalorder %s265, %s267
    %p271 = scmp.eq.s32.totalorder %s22, 0
    %p272 = por %p270, %p271
    %p273 = scmp.ne.s32.totalorder %s265, %s267
    %p274 = scmp.eq.s32.totalorder %s27, 1
    %p275 = por %p273, %p274
    %p276 = scmp.ne.s32.totalorder %s267, %s268
    %p277 = scmp.eq.s32.totalorder %s27, 0
    %p278 = por %p276, %p277
    %p279 = scmp.ne.s32.totalorder %s267, %s268
    %p280 = scmp.eq.s32.totalorder %s28, 1
    %p281 = por %p279, %p280
    %p283 = scmp.ne.s32.totalorder %s268, %s282
    %p284 = scmp.eq.s32.totalorder %s28, 0
    %p285 = por %p283, %p284
    %s287 = sadd.s32 %s286, 1
    %p290 = scmp.eq.s32.totalorder %s22, 1
    %p291 = scmp.ne.s32.totalorder %s286, %s288
    %p292 = scmp.eq.s32.totalorder %s22, 0
    %p293 = por %p291, %p292
    %p294 = scmp.ne.s32.totalorder %s286, %s288
    %p295 = scmp.eq.s32.totalorder %s27, 1
    %p296 = por %p294, %p295
    %p297 = scmp.ne.s32.totalorder %s288, %s289
    %p298 = scmp.eq.s32.totalorder %s27, 0
    %p299 = por %p297, %p298
    %p300 = scmp.ne.s32.totalorder %s288, %s289
    %p301 = scmp.eq.s32.totalorder %s28, 1
    %p302 = por %p300, %p301
    %p304 = scmp.ne.s32.totalorder %s289, %s303
    %p305 = scmp.eq.s32.totalorder %s28, 0
    %p306 = por %p304, %p305
    %s308 = sadd.s32 %s307, 1
    %p311 = scmp.eq.s32.totalorder %s22, 1
    %p312 = scmp.ne.s32.totalorder %s307, %s309
    %p313 = scmp.eq.s32.totalorder %s22, 0
    %p314 = por %p312, %p313
    %p315 = scmp.ne.s32.totalorder %s307, %s309
    %p316 = scmp.eq.s32.totalorder %s27, 1
    %p317 = por %p315, %p316
    %p318 = scmp.ne.s32.totalorder %s309, %s310
    %p319 = scmp.eq.s32.totalorder %s27, 0
    %p320 = por %p318, %p319
    %p321 = scmp.ne.s32.totalorder %s309, %s310
    %p322 = scmp.eq.s32.totalorder %s28, 1
    %p323 = por %p321, %p322
    %p325 = scmp.ne.s32.totalorder %s310, %s324
    %p326 = scmp.eq.s32.totalorder %s28, 0
    %p327 = por %p325, %p326
    %s329 = sadd.s32 %s328, 1
    %p332 = scmp.eq.s32.totalorder %s22, 1
    %p333 = scmp.ne.s32.totalorder %s328, %s330
    %p334 = scmp.eq.s32.totalorder %s22, 0
    %p335 = por %p333, %p334
    %p336 = scmp.ne.s32.totalorder %s328, %s330
    %p337 = scmp.eq.s32.totalorder %s27, 1
    %p338 = por %p336, %p337
    %p339 = scmp.ne.s32.totalorder %s330, %s331
    %p340 = scmp.eq.s32.totalorder %s27, 0
    %p341 = por %p339, %p340
    %p342 = scmp.ne.s32.totalorder %s330, %s331
    %p343 = scmp.eq.s32.totalorder %s28, 1
    %p344 = por %p342, %p343
    %p346 = scmp.ne.s32.totalorder %s331, %s345
    %p347 = scmp.eq.s32.totalorder %s28, 0
    %p348 = por %p346, %p347
    %s350 = sadd.s32 %s349, 1
    %p353 = scmp.eq.s32.totalorder %s22, 1
    %p354 = scmp.ne.s32.totalorder %s349, %s351
    %p355 = scmp.eq.s32.totalorder %s22, 0
    %p356 = por %p354, %p355
    %p357 = scmp.ne.s32.totalorder %s349, %s351
    %p358 = scmp.eq.s32.totalorder %s27, 1
    %p359 = por %p357, %p358
    %p360 = scmp.ne.s32.totalorder %s351, %s352
    %p361 = scmp.eq.s32.totalorder %s27, 0
    %p362 = por %p360, %p361
    %p363 = scmp.ne.s32.totalorder %s351, %s352
    %p364 = scmp.eq.s32.totalorder %s28, 1
    %p365 = por %p363, %p364
    %p367 = scmp.ne.s32.totalorder %s352, %s366
    %p368 = scmp.eq.s32.totalorder %s28, 0
    %p369 = por %p367, %p368
    %s371 = sadd.s32 %s370, 1
    %p374 = scmp.eq.s32.totalorder %s22, 1
    %p375 = scmp.ne.s32.totalorder %s370, %s372
    %p376 = scmp.eq.s32.totalorder %s22, 0
    %p377 = por %p375, %p376
    %p378 = scmp.ne.s32.totalorder %s370, %s372
    %p379 = scmp.eq.s32.totalorder %s27, 1
    %p380 = por %p378, %p379
    %p381 = scmp.ne.s32.totalorder %s372, %s373
    %p382 = scmp.eq.s32.totalorder %s27, 0
    %p383 = por %p381, %p382
    %p384 = scmp.ne.s32.totalorder %s372, %s373
    %p385 = scmp.eq.s32.totalorder %s28, 1
    %p386 = por %p384, %p385
    %p388 = scmp.ne.s32.totalorder %s373, %s387
    %p389 = scmp.eq.s32.totalorder %s28, 0
    %p390 = por %p388, %p389
    %s391 = ssub.s32 %s22, %s29
    %p392 = scmp.eq.s32.totalorder %s391, 0
    %s394 = sadd.s32 %s393, 1
    %s395 = scalar_select %p392, %s393, %s394
    %p398 = pneg %p392
    %p399 = scmp.eq.s32.totalorder %s22, 1
    %p400 = por %p398, %p399
    %p401 = scmp.ne.s32.totalorder %s393, %s396
    %p402 = scmp.eq.s32.totalorder %s22, 0
    %p403 = por %p401, %p402
    %p404 = scmp.ne.s32.totalorder %s393, %s396
    %p405 = scmp.eq.s32.totalorder %s27, 1
    %p406 = por %p404, %p405
    %p407 = scmp.ne.s32.totalorder %s396, %s397
    %p408 = scmp.eq.s32.totalorder %s27, 0
    %p409 = por %p407, %p408
    %p410 = scmp.ne.s32.totalorder %s396, %s397
    %p411 = scmp.eq.s32.totalorder %s28, 1
    %p412 = por %p410, %p411
    %p414 = scmp.ne.s32.totalorder %s397, %s413
    %p415 = scmp.eq.s32.totalorder %s28, 0
    %p416 = por %p414, %p415
    %p417 = scmp.le.s32.totalorder 1, %s22
    %p418 = scmp.lt.s32.totalorder %s22, 3
    %p419 = pnand %p417, %p418
    %p420 = pneg %p419
    // Predicated region
    $region9: #{neucf_forward.1} parent=5 // pred_check
      _
    $region10: #{neucf_forward.1} parent=5 // pred_check_branch
      %422 = sbr.rel (%p419) target = $region12
    $region11: #{neucf_forward.1} parent=5 // pred_region
      %s423 = ssub.s32 %s22, 1
      // Predicated region
      $region13: #{neucf_forward.1} parent=11 // pred_check
        %p424 = pneg %p173
      $region14: #{neucf_forward.1} parent=11 // pred_check_branch
        %426 = sbr.rel (%p424) target = $region16
      $region15: #{neucf_forward.1} parent=11 // pred_region
        _
      $region16: #{neucf_forward.1} parent=11 // pred_fallthru
        _
      // Predicated region
      $region17: #{neucf_forward.1} parent=11 // pred_check
        %p427 = pneg %p194
      $region18: #{neucf_forward.1} parent=11 // pred_check_branch
        %429 = sbr.rel (%p427) target = $region20
      $region19: #{neucf_forward.1} parent=11 // pred_region
        _
      $region20: #{neucf_forward.1} parent=11 // pred_fallthru
        _
      // Predicated region
      $region21: #{neucf_forward.1} parent=11 // pred_check
        %p430 = pneg %p215
      $region22: #{neucf_forward.1} parent=11 // pred_check_branch
        %432 = sbr.rel (%p430) target = $region24
      $region23: #{neucf_forward.1} parent=11 // pred_region
        _
      $region24: #{neucf_forward.1} parent=11 // pred_fallthru
        _
      // Predicated region
      $region25: #{neucf_forward.1} parent=11 // pred_check
        %p433 = pneg %p236
      $region26: #{neucf_forward.1} parent=11 // pred_check_branch
        %435 = sbr.rel (%p433) target = $region28
      $region27: #{neucf_forward.1} parent=11 // pred_region
        _
      $region28: #{neucf_forward.1} parent=11 // pred_fallthru
        _
      // Predicated region
      $region29: #{neucf_forward.1} parent=11 // pred_check
        %p436 = pneg %p257
      $region30: #{neucf_forward.1} parent=11 // pred_check_branch
        %438 = sbr.rel (%p436) target = $region32
      $region31: #{neucf_forward.1} parent=11 // pred_region
        _
      $region32: #{neucf_forward.1} parent=11 // pred_fallthru
        _
      // Predicated region
      $region33: #{neucf_forward.1} parent=11 // pred_check
        %p439 = pneg %p278
      $region34: #{neucf_forward.1} parent=11 // pred_check_branch
        %441 = sbr.rel (%p439) target = $region36
      $region35: #{neucf_forward.1} parent=11 // pred_region
        _
      $region36: #{neucf_forward.1} parent=11 // pred_fallthru
        _
      // Predicated region
      $region37: #{neucf_forward.1} parent=11 // pred_check
        %p442 = pneg %p299
      $region38: #{neucf_forward.1} parent=11 // pred_check_branch
        %444 = sbr.rel (%p442) target = $region40
      $region39: #{neucf_forward.1} parent=11 // pred_region
        _
      $region40: #{neucf_forward.1} parent=11 // pred_fallthru
        _
      // Predicated region
      $region41: #{neucf_forward.1} parent=11 // pred_check
        %p445 = pneg %p320
      $region42: #{neucf_forward.1} parent=11 // pred_check_branch
        %447 = sbr.rel (%p445) target = $region44
      $region43: #{neucf_forward.1} parent=11 // pred_region
        _
      $region44: #{neucf_forward.1} parent=11 // pred_fallthru
        _
      // Predicated region
      $region45: #{neucf_forward.1} parent=11 // pred_check
        %p448 = pneg %p341
      $region46: #{neucf_forward.1} parent=11 // pred_check_branch
        %450 = sbr.rel (%p448) target = $region48
      $region47: #{neucf_forward.1} parent=11 // pred_region
        _
      $region48: #{neucf_forward.1} parent=11 // pred_fallthru
        _
      // Predicated region
      $region49: #{neucf_forward.1} parent=11 // pred_check
        %p451 = pneg %p362
      $region50: #{neucf_forward.1} parent=11 // pred_check_branch
        %453 = sbr.rel (%p451) target = $region52
      $region51: #{neucf_forward.1} parent=11 // pred_region
        _
      $region52: #{neucf_forward.1} parent=11 // pred_fallthru
        _
      // Predicated region
      $region53: #{neucf_forward.1} parent=11 // pred_check
        %p454 = pneg %p383
      $region54: #{neucf_forward.1} parent=11 // pred_check_branch
        %456 = sbr.rel (%p454) target = $region56
      $region55: #{neucf_forward.1} parent=11 // pred_region
        _
      $region56: #{neucf_forward.1} parent=11 // pred_fallthru
        _
    $region12: #{neucf_forward.1} parent=5 // pred_fallthru
      _
    %p457 = scmp.lt.s32.totalorder %s22, 2
    // Predicated region
    $region57: #{neucf_forward.1} parent=5 // pred_check
      %p458 = pneg %p457
    $region58: #{neucf_forward.1} parent=5 // pred_check_branch
      %460 = sbr.rel (%p458) target = $region60
    $region59: #{neucf_forward.1} parent=5 // pred_region
      // Predicated region
      $region61: #{neucf_forward.1} parent=59 // pred_check
        %p461 = pneg %p42
      $region62: #{neucf_forward.1} parent=59 // pred_check_branch
        %463 = sbr.rel (%p461) target = $region64
      $region63: #{neucf_forward.1} parent=59 // pred_region
        %s464 = smul.u32 32, %s22
        %p465 = scmp.lt.s32.totalorder %s464, 63
        %s466 = scalar_select %p465, %s464, 63
        %s467 = smul.addr %s466, 8
        %s468 = scalar_lea.vmem %s0, %s467
        %s469 = smul.u32 32, %s22
      $region64: #{neucf_forward.1} parent=59 // pred_fallthru
        _
      // Predicated region
      $region65: #{neucf_forward.1} parent=59 // pred_check
        %p470 = pneg %p68
      $region66: #{neucf_forward.1} parent=59 // pred_check_branch
        %472 = sbr.rel (%p470) target = $region68
      $region67: #{neucf_forward.1} parent=59 // pred_region
        %s473 = smul.u32 32, %s22
        %p474 = scmp.lt.s32.totalorder %s473, 63
        %s475 = scalar_select %p474, %s473, 63
        %s476 = smul.addr %s475, 8
        %s477 = scalar_lea.vmem %s1, %s476
        %s478 = smul.u32 32, %s22
      $region68: #{neucf_forward.1} parent=59 // pred_fallthru
        _
      // Predicated region
      $region69: #{neucf_forward.1} parent=59 // pred_check
        %p479 = pneg %p94
      $region70: #{neucf_forward.1} parent=59 // pred_check_branch
        %481 = sbr.rel (%p479) target = $region72
      $region71: #{neucf_forward.1} parent=59 // pred_region
        %s482 = smul.u32 32, %s22
        %p483 = scmp.lt.s32.totalorder %s482, 63
        %s484 = scalar_select %p483, %s482, 63
        %s485 = smul.addr %s484, 8
        %s486 = scalar_lea.vmem %s2, %s485
        %s487 = smul.u32 32, %s22
      $region72: #{neucf_forward.1} parent=59 // pred_fallthru
        _
      // Predicated region
      $region73: #{neucf_forward.1} parent=59 // pred_check
        %p488 = pneg %p120
      $region74: #{neucf_forward.1} parent=59 // pred_check_branch
        %490 = sbr.rel (%p488) target = $region76
      $region75: #{neucf_forward.1} parent=59 // pred_region
        %s491 = smul.u32 32, %s22
        %p492 = scmp.lt.s32.totalorder %s491, 63
        %s493 = scalar_select %p492, %s491, 63
        %s494 = smul.addr %s493, 8
        %s495 = scalar_lea.vmem %s3, %s494
        %s496 = smul.u32 32, %s22
      $region76: #{neucf_forward.1} parent=59 // pred_fallthru
        _
      // Predicated region
      $region77: #{neucf_forward.1} parent=59 // pred_check
        %p497 = pneg %p146
      $region78: #{neucf_forward.1} parent=59 // pred_check_branch
        %499 = sbr.rel (%p497) target = $region80
      $region79: #{neucf_forward.1} parent=59 // pred_region
        %s500 = smul.u32 32, %s22
        %p501 = scmp.lt.s32.totalorder %s500, 63
        %s502 = scalar_select %p501, %s500, 63
        %s503 = smul.addr %s502, 8
        %s504 = scalar_lea.vmem %s4, %s503
        %s505 = smul.u32 32, %s22
      $region80: #{neucf_forward.1} parent=59 // pred_fallthru
        _
    $region60: #{neucf_forward.1} parent=5 // pred_fallthru
      _
    %p506 = scmp.le.s32.totalorder 1, %s22
    %p507 = scmp.lt.s32.totalorder %s22, 3
    %p508 = pnand %p506, %p507
    %p509 = pneg %p508
    // Predicated region
    $region81: #{neucf_forward.1} parent=5 // pred_check
      _
    $region82: #{neucf_forward.1} parent=5 // pred_check_branch
      %511 = sbr.rel (%p508) target = $region84
    $region83: #{neucf_forward.1} parent=5 // pred_region
      %s512 = ssub.s32 %s22, 1
      %s513 = smul.u32 32, %s27
      %p514 = scmp.lt.s32.totalorder %s513, 63
      %s515 = scalar_select %p514, %s513, 63
      %s516 = smul.addr %s515, 8
      %s517 = scalar_lea.vmem %s0, %s516
      %p518 = pneg %p48
      %p519 = pneg %p45
      %s520 = smul.u32 32, %s27
      %p521 = scmp.lt.s32.totalorder %s520, 63
      %s522 = scalar_select %p521, %s520, 63
      %s523 = smul.addr %s522, 8
      %s524 = scalar_lea.vmem %s1, %s523
      %p525 = pneg %p74
      %p526 = pneg %p71
      %s527 = smul.u32 32, %s27
      %p528 = scmp.lt.s32.totalorder %s527, 63
      %s529 = scalar_select %p528, %s527, 63
      %s530 = smul.addr %s529, 8
      %s531 = scalar_lea.vmem %s2, %s530
      %p532 = pneg %p100
      %p533 = pneg %p97
      %s534 = smul.u32 32, %s27
      %p535 = scmp.lt.s32.totalorder %s534, 63
      %s536 = scalar_select %p535, %s534, 63
      %s537 = smul.addr %s536, 8
      %s538 = scalar_lea.vmem %s3, %s537
      %p539 = pneg %p126
      %p540 = pneg %p123
      %s541 = smul.u32 32, %s27
      %p542 = scmp.lt.s32.totalorder %s541, 63
      %s543 = scalar_select %p542, %s541, 63
      %s544 = smul.addr %s543, 8
      %s545 = scalar_lea.vmem %s4, %s544
      %p546 = pneg %p152
      %p547 = pneg %p149
      %p548 = pneg %p173
      %p549 = pneg %p170
      %p550 = pneg %p194
      %p551 = pneg %p191
      %p552 = pneg %p215
      %p553 = pneg %p212
      %p554 = pneg %p236
      %p555 = pneg %p233
      %p556 = pneg %p257
      %p557 = pneg %p254
      %p558 = pneg %p278
      %p559 = pneg %p275
      %p560 = pneg %p299
      %p561 = pneg %p296
      %p562 = pneg %p320
      %p563 = pneg %p317
      %p564 = pneg %p341
      %p565 = pneg %p338
      %p566 = pneg %p362
      %p567 = pneg %p359
      %p568 = pneg %p383
      %p569 = pneg %p380
      %p570 = pneg %p409
      %p571 = pneg %p406
      %s572 = smul.u32 32, %s27
      %p573 = scmp.lt.s32.totalorder %s572, 63
      %s574 = scalar_select %p573, %s572, 63
      %s575 = smul.addr %s574, 8
      %s576 = scalar_lea.vmem %s16, %s575
      %s577 = smul.u32 32, %s27
      %p578 = scmp.lt.s32.totalorder %s577, 63
      %s579 = scalar_select %p578, %s577, 63
      %s580 = smul.addr %s579, 8
      %s581 = scalar_lea.vmem %s0, %s580
      %s582 = smul.u32 32, %s27
      %s583 = smul.u32 32, %s27
      %p584 = scmp.lt.s32.totalorder %s583, 63
      %s585 = scalar_select %p584, %s583, 63
      %s586 = smul.addr %s585, 8
      %s587 = scalar_lea.vmem %s1, %s586
      %s588 = smul.u32 32, %s27
      %s589 = smul.u32 32, %s27
      %p590 = scmp.lt.s32.totalorder %s589, 63
      %s591 = scalar_select %p590, %s589, 63
      %s592 = smul.addr %s591, 8
      %s593 = scalar_lea.vmem %s2, %s592
      %s594 = smul.u32 32, %s27
      %s595 = smul.u32 32, %s27
      %p596 = scmp.lt.s32.totalorder %s595, 63
      %s597 = scalar_select %p596, %s595, 63
      %s598 = smul.addr %s597, 8
      %s599 = scalar_lea.vmem %s3, %s598
      %s600 = smul.u32 32, %s27
      %s601 = smul.u32 32, %s27
      %p602 = scmp.lt.s32.totalorder %s601, 63
      %s603 = scalar_select %p602, %s601, 63
      %s604 = smul.addr %s603, 8
      %s605 = scalar_lea.vmem %s4, %s604
      %s606 = smul.u32 32, %s27
      %s607 = smul.u32 32, %s27
      %p608 = scmp.lt.s32.totalorder %s607, 63
      %s609 = scalar_select %p608, %s607, 63
      %s610 = smul.addr %s609, 8
      %s611 = scalar_lea.vmem %s16, %s610
      %s612 = smul.u32 32, %s27
      %v614 = vld [vmem:[%s581] sm:$0xff]
      %v615 = vld [vmem:[%s581 + $0x8] sm:$0xff]
      %v616 = vld [vmem:[%s581 + $0x10] sm:$0xff]
      %v617 = vld [vmem:[%s581 + $0x18] sm:$0xff]
      %v618 = vld [vmem:[%s581 + $0x20] sm:$0xff]
      %v619 = vld [vmem:[%s581 + $0x28] sm:$0xff]
      %v620 = vld [vmem:[%s581 + $0x30] sm:$0xff]
      %v621 = vld [vmem:[%s581 + $0x38] sm:$0xff]
      %v622 = vld [vmem:[%s581 + $0x40] sm:$0xff]
      %v623 = vld [vmem:[%s581 + $0x48] sm:$0xff]
      %v624 = vld [vmem:[%s581 + $0x50] sm:$0xff]
      %v625 = vld [vmem:[%s581 + $0x58] sm:$0xff]
      %v626 = vld [vmem:[%s581 + $0x60] sm:$0xff]
      %v627 = vld [vmem:[%s581 + $0x68] sm:$0xff]
      %v628 = vld [vmem:[%s581 + $0x70] sm:$0xff]
      %v629 = vld [vmem:[%s581 + $0x78] sm:$0xff]
      %v630 = vld [vmem:[%s581 + $0x80] sm:$0xff]
      %v631 = vld [vmem:[%s581 + $0x88] sm:$0xff]
      %v632 = vld [vmem:[%s581 + $0x90] sm:$0xff]
      %v633 = vld [vmem:[%s581 + $0x98] sm:$0xff]
      %v634 = vld [vmem:[%s581 + $0xa0] sm:$0xff]
      %v635 = vld [vmem:[%s581 + $0xa8] sm:$0xff]
      %v636 = vld [vmem:[%s581 + $0xb0] sm:$0xff]
      %v637 = vld [vmem:[%s581 + $0xb8] sm:$0xff]
      %v638 = vld [vmem:[%s581 + $0xc0] sm:$0xff]
      %v639 = vld [vmem:[%s581 + $0xc8] sm:$0xff]
      %v640 = vld [vmem:[%s581 + $0xd0] sm:$0xff]
      %v641 = vld [vmem:[%s581 + $0xd8] sm:$0xff]
      %v642 = vld [vmem:[%s581 + $0xe0] sm:$0xff]
      %v643 = vld [vmem:[%s581 + $0xe8] sm:$0xff]
      %v644 = vld [vmem:[%s581 + $0xf0] sm:$0xff]
      %v645 = vld [vmem:[%s581 + $0xf8] sm:$0xff]
      %v646 = vld [vmem:[%s587] sm:$0xff]
      %v647 = vld [vmem:[%s587 + $0x8] sm:$0xff]
      %v648 = vld [vmem:[%s587 + $0x10] sm:$0xff]
      %v649 = vld [vmem:[%s587 + $0x18] sm:$0xff]
      %v650 = vld [vmem:[%s587 + $0x20] sm:$0xff]
      %v651 = vld [vmem:[%s587 + $0x28] sm:$0xff]
      %v652 = vld [vmem:[%s587 + $0x30] sm:$0xff]
      %v653 = vld [vmem:[%s587 + $0x38] sm:$0xff]
      %v654 = vld [vmem:[%s587 + $0x40] sm:$0xff]
      %v655 = vld [vmem:[%s587 + $0x48] sm:$0xff]
      %v656 = vld [vmem:[%s587 + $0x50] sm:$0xff]
      %v657 = vld [vmem:[%s587 + $0x58] sm:$0xff]
      %v658 = vld [vmem:[%s587 + $0x60] sm:$0xff]
      %v659 = vld [vmem:[%s587 + $0x68] sm:$0xff]
      %v660 = vld [vmem:[%s587 + $0x70] sm:$0xff]
      %v661 = vld [vmem:[%s587 + $0x78] sm:$0xff]
      %v662 = vld [vmem:[%s587 + $0x80] sm:$0xff]
      %v663 = vld [vmem:[%s587 + $0x88] sm:$0xff]
      %v664 = vld [vmem:[%s587 + $0x90] sm:$0xff]
      %v665 = vld [vmem:[%s587 + $0x98] sm:$0xff]
      %v666 = vld [vmem:[%s587 + $0xa0] sm:$0xff]
      %v667 = vld [vmem:[%s587 + $0xa8] sm:$0xff]
      %v668 = vld [vmem:[%s587 + $0xb0] sm:$0xff]
      %v669 = vld [vmem:[%s587 + $0xb8] sm:$0xff]
      %v670 = vld [vmem:[%s587 + $0xc0] sm:$0xff]
      %v671 = vld [vmem:[%s587 + $0xc8] sm:$0xff]
      %v672 = vld [vmem:[%s587 + $0xd0] sm:$0xff]
      %v673 = vld [vmem:[%s587 + $0xd8] sm:$0xff]
      %v674 = vld [vmem:[%s587 + $0xe0] sm:$0xff]
      %v675 = vld [vmem:[%s587 + $0xe8] sm:$0xff]
      %v676 = vld [vmem:[%s587 + $0xf0] sm:$0xff]
      %v677 = vld [vmem:[%s587 + $0xf8] sm:$0xff]
      %v678 = vmul.f32 %v614, %v646
      %v679 = vmul.f32 %v615, %v647
      %v680 = vmul.f32 %v616, %v648
      %v681 = vmul.f32 %v617, %v649
      %v682 = vmul.f32 %v618, %v650
      %v683 = vmul.f32 %v619, %v651
      %v684 = vmul.f32 %v620, %v652
      %v685 = vmul.f32 %v621, %v653
      %v686 = vmul.f32 %v622, %v654
      %v687 = vmul.f32 %v623, %v655
      %v688 = vmul.f32 %v624, %v656
      %v689 = vmul.f32 %v625, %v657
      %v690 = vmul.f32 %v626, %v658
      %v691 = vmul.f32 %v627, %v659
      %v692 = vmul.f32 %v628, %v660
      %v693 = vmul.f32 %v629, %v661
      %v694 = vmul.f32 %v630, %v662
      %v695 = vmul.f32 %v631, %v663
      %v696 = vmul.f32 %v632, %v664
      %v697 = vmul.f32 %v633, %v665
      %v698 = vmul.f32 %v634, %v666
      %v699 = vmul.f32 %v635, %v667
      %v700 = vmul.f32 %v636, %v668
      %v701 = vmul.f32 %v637, %v669
      %v702 = vmul.f32 %v638, %v670
      %v703 = vmul.f32 %v639, %v671
      %v704 = vmul.f32 %v640, %v672
      %v705 = vmul.f32 %v641, %v673
      %v706 = vmul.f32 %v642, %v674
      %v707 = vmul.f32 %v643, %v675
      %v708 = vmul.f32 %v644, %v676
      %v709 = vmul.f32 %v645, %v677
      %v710 = vld [vmem:[%s593] sm:$0xff]
      %v711 = vld [vmem:[%s593 + $0x8] sm:$0xff]
      %v712 = vld [vmem:[%s593 + $0x10] sm:$0xff]
      %v713 = vld [vmem:[%s593 + $0x18] sm:$0xff]
      %v714 = vld [vmem:[%s593 + $0x20] sm:$0xff]
      %v715 = vld [vmem:[%s593 + $0x28] sm:$0xff]
      %v716 = vld [vmem:[%s593 + $0x30] sm:$0xff]
      %v717 = vld [vmem:[%s593 + $0x38] sm:$0xff]
      %v718 = vld [vmem:[%s593 + $0x40] sm:$0xff]
      %v719 = vld [vmem:[%s593 + $0x48] sm:$0xff]
      %v720 = vld [vmem:[%s593 + $0x50] sm:$0xff]
      %v721 = vld [vmem:[%s593 + $0x58] sm:$0xff]
      %v722 = vld [vmem:[%s593 + $0x60] sm:$0xff]
      %v723 = vld [vmem:[%s593 + $0x68] sm:$0xff]
      %v724 = vld [vmem:[%s593 + $0x70] sm:$0xff]
      %v725 = vld [vmem:[%s593 + $0x78] sm:$0xff]
      %v726 = vld [vmem:[%s593 + $0x80] sm:$0xff]
      %v727 = vld [vmem:[%s593 + $0x88] sm:$0xff]
      %v728 = vld [vmem:[%s593 + $0x90] sm:$0xff]
      %v729 = vld [vmem:[%s593 + $0x98] sm:$0xff]
      %v730 = vld [vmem:[%s593 + $0xa0] sm:$0xff]
      %v731 = vld [vmem:[%s593 + $0xa8] sm:$0xff]
      %v732 = vld [vmem:[%s593 + $0xb0] sm:$0xff]
      %v733 = vld [vmem:[%s593 + $0xb8] sm:$0xff]
      %v734 = vld [vmem:[%s593 + $0xc0] sm:$0xff]
      %v735 = vld [vmem:[%s593 + $0xc8] sm:$0xff]
      %v736 = vld [vmem:[%s593 + $0xd0] sm:$0xff]
      %v737 = vld [vmem:[%s593 + $0xd8] sm:$0xff]
      %v738 = vld [vmem:[%s593 + $0xe0] sm:$0xff]
      %v739 = vld [vmem:[%s593 + $0xe8] sm:$0xff]
      %v740 = vld [vmem:[%s593 + $0xf0] sm:$0xff]
      %v741 = vld [vmem:[%s593 + $0xf8] sm:$0xff]
      %v742 = vld [vmem:[%s5] sm:$0xf]
      %v743 = vld [vmem:[%s5 + $0x4] sm:$0xf]
      %v744 = vld [vmem:[%s5 + $0x8] sm:$0xf]
      %v745 = vld [vmem:[%s5 + $0xc] sm:$0xf]
      %v746 = vpack.c.bf16 %v711, %v710
      %v747 = vpack.c.bf16 %v713, %v712
      %v748 = vpack.c.bf16 %v715, %v714
      %v749 = vpack.c.bf16 %v717, %v716
      %v750 = vpack.c.bf16 %v719, %v718
      %v751 = vpack.c.bf16 %v721, %v720
      %v752 = vpack.c.bf16 %v723, %v722
      %v753 = vpack.c.bf16 %v725, %v724
      %v754 = vpack.c.bf16 %v727, %v726
      %v755 = vpack.c.bf16 %v729, %v728
      %v756 = vpack.c.bf16 %v731, %v730
      %v757 = vpack.c.bf16 %v733, %v732
      %v758 = vpack.c.bf16 %v735, %v734
      %v759 = vpack.c.bf16 %v737, %v736
      %v760 = vpack.c.bf16 %v739, %v738
      %v761 = vpack.c.bf16 %v741, %v740
      %v762 = vld [vmem:[%s599] sm:$0xff]
      %v763 = vld [vmem:[%s599 + $0x8] sm:$0xff]
      %v764 = vld [vmem:[%s599 + $0x10] sm:$0xff]
      %v765 = vld [vmem:[%s599 + $0x18] sm:$0xff]
      %v766 = vld [vmem:[%s599 + $0x20] sm:$0xff]
      %v767 = vld [vmem:[%s599 + $0x28] sm:$0xff]
      %v768 = vld [vmem:[%s599 + $0x30] sm:$0xff]
      %v769 = vld [vmem:[%s599 + $0x38] sm:$0xff]
      %v770 = vld [vmem:[%s599 + $0x40] sm:$0xff]
      %v771 = vld [vmem:[%s599 + $0x48] sm:$0xff]
      %v772 = vld [vmem:[%s599 + $0x50] sm:$0xff]
      %v773 = vld [vmem:[%s599 + $0x58] sm:$0xff]
      %v774 = vld [vmem:[%s599 + $0x60] sm:$0xff]
      %v775 = vld [vmem:[%s599 + $0x68] sm:$0xff]
      %v776 = vld [vmem:[%s599 + $0x70] sm:$0xff]
      %v777 = vld [vmem:[%s599 + $0x78] sm:$0xff]
      %v778 = vld [vmem:[%s599 + $0x80] sm:$0xff]
      %v779 = vld [vmem:[%s599 + $0x88] sm:$0xff]
      %v780 = vld [vmem:[%s599 + $0x90] sm:$0xff]
      %v781 = vld [vmem:[%s599 + $0x98] sm:$0xff]
      %v782 = vld [vmem:[%s599 + $0xa0] sm:$0xff]
      %v783 = vld [vmem:[%s599 + $0xa8] sm:$0xff]
      %v784 = vld [vmem:[%s599 + $0xb0] sm:$0xff]
      %v785 = vld [vmem:[%s599 + $0xb8] sm:$0xff]
      %v786 = vld [vmem:[%s599 + $0xc0] sm:$0xff]
      %v787 = vld [vmem:[%s599 + $0xc8] sm:$0xff]
      %v788 = vld [vmem:[%s599 + $0xd0] sm:$0xff]
      %v789 = vld [vmem:[%s599 + $0xd8] sm:$0xff]
      %v790 = vld [vmem:[%s599 + $0xe0] sm:$0xff]
      %v791 = vld [vmem:[%s599 + $0xe8] sm:$0xff]
      %v792 = vld [vmem:[%s599 + $0xf0] sm:$0xff]
      %v793 = vld [vmem:[%s599 + $0xf8] sm:$0xff]
      %v794 = vld [vmem:[%s6] sm:$0xf]
      %v795 = vld [vmem:[%s6 + $0x4] sm:$0xf]
      %v796 = vld [vmem:[%s6 + $0x8] sm:$0xf]
      %v797 = vld [vmem:[%s6 + $0xc] sm:$0xf]
      %v798 = vpack.c.bf16 %v763, %v762
      %v799 = vpack.c.bf16 %v765, %v764
      %v800 = vpack.c.bf16 %v767, %v766
      %v801 = vpack.c.bf16 %v769, %v768
      %v802 = vpack.c.bf16 %v771, %v770
      %v803 = vpack.c.bf16 %v773, %v772
      %v804 = vpack.c.bf16 %v775, %v774
      %v805 = vpack.c.bf16 %v777, %v776
      %v806 = vpack.c.bf16 %v779, %v778
      %v807 = vpack.c.bf16 %v781, %v780
      %v808 = vpack.c.bf16 %v783, %v782
      %v809 = vpack.c.bf16 %v785, %v784
      %v810 = vpack.c.bf16 %v787, %v786
      %v811 = vpack.c.bf16 %v789, %v788
      %v812 = vpack.c.bf16 %v791, %v790
      %v813 = vpack.c.bf16 %v793, %v792
      %v818 = vunpack.c.l.b16 %v794
      %v819 = vunpack.c.l.b16 %v795
      %v820 = vunpack.c.l.b16 %v796
      %v821 = vunpack.c.l.b16 %v797
      %v822 = vpack.c.b16 %v819, %v818
      %v823 = vpack.c.b16 %v821, %v820
      %vm826 = vcmask 261120
      %v828 = vsel %vm826, %v798, 0
      %v831 = vsel %vm826, %v799, 0
      %v834 = vsel %vm826, %v800, 0
      %v837 = vsel %vm826, %v801, 0
      %v840 = vsel %vm826, %v802, 0
      %v843 = vsel %vm826, %v803, 0
      %v846 = vsel %vm826, %v804, 0
      %v849 = vsel %vm826, %v805, 0
      %v852 = vsel %vm826, %v806, 0
      %v855 = vsel %vm826, %v807, 0
      %v858 = vsel %vm826, %v808, 0
      %v861 = vsel %vm826, %v809, 0
      %v864 = vsel %vm826, %v810, 0
      %v867 = vsel %vm826, %v811, 0
      %v870 = vsel %vm826, %v812, 0
      %v873 = vsel %vm826, %v813, 0
      %875 = vmatprep.subr.bf16.mxu0 0
      %876 = vmatpush1.bf16.msra.mxu0 %v822
      %877 = vmatprep.subr.bf16.mxu0 0
      %878 = vmatpush1.bf16.msra.mxu0 %v823
      %879 = vmatprep.subr.bf16.mxu0 0
      %880 = vmatpush1.bf16.msra.mxu0 0
      %881 = vmatprep.subr.bf16.mxu0 0
      %882 = vmatpush1.bf16.msra.mxu0 0
      %883 = vmatprep.subr.bf16.mxu0 0
      %884 = vmatpush1.bf16.msra.mxu0 0
      %885 = vmatprep.subr.bf16.mxu0 0
      %886 = vmatpush1.bf16.msra.mxu0 0
      %887 = vmatprep.subr.bf16.mxu0 0
      %888 = vmatpush1.bf16.msra.mxu0 0
      %889 = vmatprep.subr.bf16.mxu0 0
      %890 = vmatpush1.bf16.msra.mxu0 0
      %891 = vmatprep.subr.bf16.mxu0 0
      %892 = vmatpush1.bf16.msra.mxu0 0
      %893 = vmatprep.subr.bf16.mxu0 0
      %894 = vmatpush1.bf16.msra.mxu0 0
      %895 = vmatprep.subr.bf16.mxu0 0
      %896 = vmatpush1.bf16.msra.mxu0 0
      %897 = vmatprep.subr.bf16.mxu0 0
      %898 = vmatpush1.bf16.msra.mxu0 0
      %899 = vmatprep.subr.bf16.mxu0 0
      %900 = vmatpush1.bf16.msra.mxu0 0
      %901 = vmatprep.subr.bf16.mxu0 0
      %902 = vmatpush1.bf16.msra.mxu0 0
      %903 = vmatprep.subr.bf16.mxu0 0
      %904 = vmatpush1.bf16.msra.mxu0 0
      %905 = vmatprep.subr.bf16.mxu0 0
      %906 = vmatpush1.bf16.msra.mxu0 0
      %907 = vmatprep.mubr.bf16.mxu0 0
      %908 = vmatmul.mubr.bf16.gmra.mrb[0].mxu0 %v828
      %v909 = vpop.f32.mrb[0].mxu0
      %v910 = vadd.f32 0.0, %v909
      %v911 = vpop.f32.mrb[0].mxu0
      %v912 = vpop.f32.mrb[0].mxu0
      %v913 = vadd.f32 0.0, %v912
      %v914 = vpop.f32.mrb[0].mxu0
      %915 = vmatprep.mubr.bf16.mxu0 0
      %916 = vmatmul.mubr.bf16.gmra.mrb[0].mxu0 %v831
      %v917 = vpop.f32.mrb[0].mxu0
      %v918 = vadd.f32 0.0, %v917
      %v919 = vpop.f32.mrb[0].mxu0
      %v920 = vpop.f32.mrb[0].mxu0
      %v921 = vadd.f32 0.0, %v920
      %v922 = vpop.f32.mrb[0].mxu0
      %923 = vmatprep.mubr.bf16.mxu0 0
      %924 = vmatmul.mubr.bf16.gmra.mrb[0].mxu0 %v834
      %v925 = vpop.f32.mrb[0].mxu0
      %v926 = vadd.f32 0.0, %v925
      %v927 = vpop.f32.mrb[0].mxu0
      %v928 = vpop.f32.mrb[0].mxu0
      %v929 = vadd.f32 0.0, %v928
      %v930 = vpop.f32.mrb[0].mxu0
      %931 = vmatprep.mubr.bf16.mxu0 0
      %932 = vmatmul.mubr.bf16.gmra.mrb[0].mxu0 %v837
      %v933 = vpop.f32.mrb[0].mxu0
      %v934 = vadd.f32 0.0, %v933
      %v935 = vpop.f32.mrb[0].mxu0
      %v936 = vpop.f32.mrb[0].mxu0
      %v937 = vadd.f32 0.0, %v936
      %v938 = vpop.f32.mrb[0].mxu0
      %939 = vmatprep.mubr.bf16.mxu0 0
      %940 = vmatmul.mubr.bf16.gmra.mrb[0].mxu0 %v840
      %v941 = vpop.f32.mrb[0].mxu0
      %v942 = vadd.f32 0.0, %v941
      %v943 = vpop.f32.mrb[0].mxu0
      %v944 = vpop.f32.mrb[0].mxu0
      %v945 = vadd.f32 0.0, %v944
      %v946 = vpop.f32.mrb[0].mxu0
      %947 = vmatprep.mubr.bf16.mxu0 0
      %948 = vmatmul.mubr.bf16.gmra.mrb[0].mxu0 %v843
      %v949 = vpop.f32.mrb[0].mxu0
      %v950 = vadd.f32 0.0, %v949
      %v951 = vpop.f32.mrb[0].mxu0
      %v952 = vpop.f32.mrb[0].mxu0
      %v953 = vadd.f32 0.0, %v952
      %v954 = vpop.f32.mrb[0].mxu0
      %955 = vmatprep.mubr.bf16.mxu0 0
      %956 = vmatmul.mubr.bf16.gmra.mrb[0].mxu0 %v846
      %v957 = vpop.f32.mrb[0].mxu0
      %v958 = vadd.f32 0.0, %v957
      %v959 = vpop.f32.mrb[0].mxu0
      %v960 = vpop.f32.mrb[0].mxu0
      %v961 = vadd.f32 0.0, %v960
      %v962 = vpop.f32.mrb[0].mxu0
      %963 = vmatprep.mubr.bf16.mxu0 0
      %964 = vmatmul.mubr.bf16.gmra.mrb[0].mxu0 %v849
      %v965 = vpop.f32.mrb[0].mxu0
      %v966 = vadd.f32 0.0, %v965
      %v967 = vpop.f32.mrb[0].mxu0
      %v968 = vpop.f32.mrb[0].mxu0
      %v969 = vadd.f32 0.0, %v968
      %v970 = vpop.f32.mrb[0].mxu0
      %971 = vmatprep.mubr.bf16.mxu0 0
      %972 = vmatmul.mubr.bf16.gmra.mrb[0].mxu0 %v852
      %v973 = vpop.f32.mrb[0].mxu0
      %v974 = vadd.f32 0.0, %v973
      %v975 = vpop.f32.mrb[0].mxu0
      %v976 = vpop.f32.mrb[0].mxu0
      %v977 = vadd.f32 0.0, %v976
      %v978 = vpop.f32.mrb[0].mxu0
      %979 = vmatprep.mubr.bf16.mxu0 0
      %980 = vmatmul.mubr.bf16.gmra.mrb[0].mxu0 %v855
      %v981 = vpop.f32.mrb[0].mxu0
      %v982 = vadd.f32 0.0, %v981
      %v983 = vpop.f32.mrb[0].mxu0
      %v984 = vpop.f32.mrb[0].mxu0
      %v985 = vadd.f32 0.0, %v984
      %v986 = vpop.f32.mrb[0].mxu0
      %987 = vmatprep.mubr.bf16.mxu0 0
      %988 = vmatmul.mubr.bf16.gmra.mrb[0].mxu0 %v858
      %v989 = vpop.f32.mrb[0].mxu0
      %v990 = vadd.f32 0.0, %v989
      %v991 = vpop.f32.mrb[0].mxu0
      %v992 = vpop.f32.mrb[0].mxu0
      %v993 = vadd.f32 0.0, %v992
      %v994 = vpop.f32.mrb[0].mxu0
      %995 = vmatprep.mubr.bf16.mxu0 0
      %996 = vmatmul.mubr.bf16.gmra.mrb[0].mxu0 %v861
      %v997 = vpop.f32.mrb[0].mxu0
      %v998 = vadd.f32 0.0, %v997
      %v999 = vpop.f32.mrb[0].mxu0
      %v1000 = vpop.f32.mrb[0].mxu0
      %v1001 = vadd.f32 0.0, %v1000
      %v1002 = vpop.f32.mrb[0].mxu0
      %1003 = vmatprep.mubr.bf16.mxu0 0
      %1004 = vmatmul.mubr.bf16.gmra.mrb[0].mxu0 %v864
      %v1005 = vpop.f32.mrb[0].mxu0
      %v1006 = vadd.f32 0.0, %v1005
      %v1007 = vpop.f32.mrb[0].mxu0
      %v1008 = vpop.f32.mrb[0].mxu0
      %v1009 = vadd.f32 0.0, %v1008
      %v1010 = vpop.f32.mrb[0].mxu0
      %1011 = vmatprep.mubr.bf16.mxu0 0
      %1012 = vmatmul.mubr.bf16.gmra.mrb[0].mxu0 %v867
      %v1013 = vpop.f32.mrb[0].mxu0
      %v1014 = vadd.f32 0.0, %v1013
      %v1015 = vpop.f32.mrb[0].mxu0
      %v1016 = vpop.f32.mrb[0].mxu0
      %v1017 = vadd.f32 0.0, %v1016
      %v1018 = vpop.f32.mrb[0].mxu0
      %1019 = vmatprep.mubr.bf16.mxu0 0
      %1020 = vmatmul.mubr.bf16.gmra.mrb[0].mxu0 %v870
      %v1021 = vpop.f32.mrb[0].mxu0
      %v1022 = vadd.f32 0.0, %v1021
      %v1023 = vpop.f32.mrb[0].mxu0
      %v1024 = vpop.f32.mrb[0].mxu0
      %v1025 = vadd.f32 0.0, %v1024
      %v1026 = vpop.f32.mrb[0].mxu0
      %1027 = vmatprep.mubr.bf16.mxu0 0
      %1028 = vmatmul.mubr.bf16.gmra.mrb[0].mxu0 %v873
      %v1029 = vpop.f32.mrb[0].mxu0
      %v1030 = vadd.f32 0.0, %v1029
      %v1031 = vpop.f32.mrb[0].mxu0
      %v1032 = vpop.f32.mrb[0].mxu0
      %v1033 = vadd.f32 0.0, %v1032
      %v1034 = vpop.f32.mrb[0].mxu0
      %1035 = vdwg.mxu0
      %v1040 = vunpack.c.l.b16 %v742
      %v1041 = vunpack.c.l.b16 %v743
      %v1042 = vunpack.c.l.b16 %v744
      %v1043 = vunpack.c.l.b16 %v745
      %v1044 = vpack.c.b16 %v1041, %v1040
      %v1045 = vpack.c.b16 %v1043, %v1042
      %v1049 = vsel %vm826, %v746, 0
      %v1052 = vsel %vm826, %v747, 0
      %v1055 = vsel %vm826, %v748, 0
      %v1058 = vsel %vm826, %v749, 0
      %v1061 = vsel %vm826, %v750, 0
      %v1064 = vsel %vm826, %v751, 0
      %v1067 = vsel %vm826, %v752, 0
      %v1070 = vsel %vm826, %v753, 0
      %v1073 = vsel %vm826, %v754, 0
      %v1076 = vsel %vm826, %v755, 0
      %v1079 = vsel %vm826, %v756, 0
      %v1082 = vsel %vm826, %v757, 0
      %v1085 = vsel %vm826, %v758, 0
      %v1088 = vsel %vm826, %v759, 0
      %v1091 = vsel %vm826, %v760, 0
      %v1094 = vsel %vm826, %v761, 0
      %1096 = vmatprep.subr.bf16.mxu0 0
      %1097 = vmatpush1.bf16.msra.mxu0 %v1044
      %1098 = vmatprep.subr.bf16.mxu0 0
      %1099 = vmatpush1.bf16.msra.mxu0 %v1045
      %1100 = vmatprep.subr.bf16.mxu0 0
      %1101 = vmatpush1.bf16.msra.mxu0 0
      %1102 = vmatprep.subr.bf16.mxu0 0
      %1103 = vmatpush1.bf16.msra.mxu0 0
      %1104 = vmatprep.subr.bf16.mxu0 0
      %1105 = vmatpush1.bf16.msra.mxu0 0
      %1106 = vmatprep.subr.bf16.mxu0 0
      %1107 = vmatpush1.bf16.msra.mxu0 0
      %1108 = vmatprep.subr.bf16.mxu0 0
      %1109 = vmatpush1.bf16.msra.mxu0 0
      %1110 = vmatprep.subr.bf16.mxu0 0
      %1111 = vmatpush1.bf16.msra.mxu0 0
      %1112 = vmatprep.subr.bf16.mxu0 0
      %1113 = vmatpush1.bf16.msra.mxu0 0
      %1114 = vmatprep.subr.bf16.mxu0 0
      %1115 = vmatpush1.bf16.msra.mxu0 0
      %1116 = vmatprep.subr.bf16.mxu0 0
      %1117 = vmatpush1.bf16.msra.mxu0 0
      %1118 = vmatprep.subr.bf16.mxu0 0
      %1119 = vmatpush1.bf16.msra.mxu0 0
      %1120 = vmatprep.subr.bf16.mxu0 0
      %1121 = vmatpush1.bf16.msra.mxu0 0
      %1122 = vmatprep.subr.bf16.mxu0 0
      %1123 = vmatpush1.bf16.msra.mxu0 0
      %1124 = vmatprep.subr.bf16.mxu0 0
      %1125 = vmatpush1.bf16.msra.mxu0 0
      %1126 = vmatprep.subr.bf16.mxu0 0
      %1127 = vmatpush1.bf16.msra.mxu0 0
      %1128 = vmatprep.mubr.bf16.mxu0 0
      %1129 = vmatmul.mubr.bf16.gmra.mrb[0].mxu0 %v1049
      %v1130 = vpop.f32.mrb[0].mxu0
      %v1131 = vadd.f32 %v910, %v1130
      %v1132 = vpop.f32.mrb[0].mxu0
      %v1133 = vpop.f32.mrb[0].mxu0
      %v1134 = vadd.f32 %v913, %v1133
      %v1135 = vpop.f32.mrb[0].mxu0
      %1136 = vmatprep.mubr.bf16.mxu0 0
      %1137 = vmatmul.mubr.bf16.gmra.mrb[0].mxu0 %v1052
      %v1138 = vpop.f32.mrb[0].mxu0
      %v1139 = vadd.f32 %v918, %v1138
      %v1140 = vpop.f32.mrb[0].mxu0
      %v1141 = vpop.f32.mrb[0].mxu0
      %v1142 = vadd.f32 %v921, %v1141
      %v1143 = vpop.f32.mrb[0].mxu0
      %1144 = vmatprep.mubr.bf16.mxu0 0
      %1145 = vmatmul.mubr.bf16.gmra.mrb[0].mxu0 %v1055
      %v1146 = vpop.f32.mrb[0].mxu0
      %v1147 = vadd.f32 %v926, %v1146
      %v1148 = vpop.f32.mrb[0].mxu0
      %v1149 = vpop.f32.mrb[0].mxu0
      %v1150 = vadd.f32 %v929, %v1149
      %v1151 = vpop.f32.mrb[0].mxu0
      %1152 = vmatprep.mubr.bf16.mxu0 0
      %1153 = vmatmul.mubr.bf16.gmra.mrb[0].mxu0 %v1058
      %v1154 = vpop.f32.mrb[0].mxu0
      %v1155 = vadd.f32 %v934, %v1154
      %v1156 = vpop.f32.mrb[0].mxu0
      %v1157 = vpop.f32.mrb[0].mxu0
      %v1158 = vadd.f32 %v937, %v1157
      %v1159 = vpop.f32.mrb[0].mxu0
      %1160 = vmatprep.mubr.bf16.mxu0 0
      %1161 = vmatmul.mubr.bf16.gmra.mrb[0].mxu0 %v1061
      %v1162 = vpop.f32.mrb[0].mxu0
      %v1163 = vadd.f32 %v942, %v1162
      %v1164 = vpop.f32.mrb[0].mxu0
      %v1165 = vpop.f32.mrb[0].mxu0
      %v1166 = vadd.f32 %v945, %v1165
      %v1167 = vpop.f32.mrb[0].mxu0
      %1168 = vmatprep.mubr.bf16.mxu0 0
      %1169 = vmatmul.mubr.bf16.gmra.mrb[0].mxu0 %v1064
      %v1170 = vpop.f32.mrb[0].mxu0
      %v1171 = vadd.f32 %v950, %v1170
      %v1172 = vpop.f32.mrb[0].mxu0
      %v1173 = vpop.f32.mrb[0].mxu0
      %v1174 = vadd.f32 %v953, %v1173
      %v1175 = vpop.f32.mrb[0].mxu0
      %1176 = vmatprep.mubr.bf16.mxu0 0
      %1177 = vmatmul.mubr.bf16.gmra.mrb[0].mxu0 %v1067
      %v1178 = vpop.f32.mrb[0].mxu0
      %v1179 = vadd.f32 %v958, %v1178
      %v1180 = vpop.f32.mrb[0].mxu0
      %v1181 = vpop.f32.mrb[0].mxu0
      %v1182 = vadd.f32 %v961, %v1181
      %v1183 = vpop.f32.mrb[0].mxu0
      %1184 = vmatprep.mubr.bf16.mxu0 0
      %1185 = vmatmul.mubr.bf16.gmra.mrb[0].mxu0 %v1070
      %v1186 = vpop.f32.mrb[0].mxu0
      %v1187 = vadd.f32 %v966, %v1186
      %v1188 = vpop.f32.mrb[0].mxu0
      %v1189 = vpop.f32.mrb[0].mxu0
      %v1190 = vadd.f32 %v969, %v1189
      %v1191 = vpop.f32.mrb[0].mxu0
      %1192 = vmatprep.mubr.bf16.mxu0 0
      %1193 = vmatmul.mubr.bf16.gmra.mrb[0].mxu0 %v1073
      %v1194 = vpop.f32.mrb[0].mxu0
      %v1195 = vadd.f32 %v974, %v1194
      %v1196 = vpop.f32.mrb[0].mxu0
      %v1197 = vpop.f32.mrb[0].mxu0
      %v1198 = vadd.f32 %v977, %v1197
      %v1199 = vpop.f32.mrb[0].mxu0
      %1200 = vmatprep.mubr.bf16.mxu0 0
      %1201 = vmatmul.mubr.bf16.gmra.mrb[0].mxu0 %v1076
      %v1202 = vpop.f32.mrb[0].mxu0
      %v1203 = vadd.f32 %v982, %v1202
      %v1204 = vpop.f32.mrb[0].mxu0
      %v1205 = vpop.f32.mrb[0].mxu0
      %v1206 = vadd.f32 %v985, %v1205
      %v1207 = vpop.f32.mrb[0].mxu0
      %1208 = vmatprep.mubr.bf16.mxu0 0
      %1209 = vmatmul.mubr.bf16.gmra.mrb[0].mxu0 %v1079
      %v1210 = vpop.f32.mrb[0].mxu0
      %v1211 = vadd.f32 %v990, %v1210
      %v1212 = vpop.f32.mrb[0].mxu0
      %v1213 = vpop.f32.mrb[0].mxu0
      %v1214 = vadd.f32 %v993, %v1213
      %v1215 = vpop.f32.mrb[0].mxu0
      %1216 = vmatprep.mubr.bf16.mxu0 0
      %1217 = vmatmul.mubr.bf16.gmra.mrb[0].mxu0 %v1082
      %v1218 = vpop.f32.mrb[0].mxu0
      %v1219 = vadd.f32 %v998, %v1218
      %v1220 = vpop.f32.mrb[0].mxu0
      %v1221 = vpop.f32.mrb[0].mxu0
      %v1222 = vadd.f32 %v1001, %v1221
      %v1223 = vpop.f32.mrb[0].mxu0
      %1224 = vmatprep.mubr.bf16.mxu0 0
      %1225 = vmatmul.mubr.bf16.gmra.mrb[0].mxu0 %v1085
      %v1226 = vpop.f32.mrb[0].mxu0
      %v1227 = vadd.f32 %v1006, %v1226
      %v1228 = vpop.f32.mrb[0].mxu0
      %v1229 = vpop.f32.mrb[0].mxu0
      %v1230 = vadd.f32 %v1009, %v1229
      %v1231 = vpop.f32.mrb[0].mxu0
      %1232 = vmatprep.mubr.bf16.mxu0 0
      %1233 = vmatmul.mubr.bf16.gmra.mrb[0].mxu0 %v1088
      %v1234 = vpop.f32.mrb[0].mxu0
      %v1235 = vadd.f32 %v1014, %v1234
      %v1236 = vpop.f32.mrb[0].mxu0
      %v1237 = vpop.f32.mrb[0].mxu0
      %v1238 = vadd.f32 %v1017, %v1237
      %v1239 = vpop.f32.mrb[0].mxu0
      %1240 = vmatprep.mubr.bf16.mxu0 0
      %1241 = vmatmul.mubr.bf16.gmra.mrb[0].mxu0 %v1091
      %v1242 = vpop.f32.mrb[0].mxu0
      %v1243 = vadd.f32 %v1022, %v1242
      %v1244 = vpop.f32.mrb[0].mxu0
      %v1245 = vpop.f32.mrb[0].mxu0
      %v1246 = vadd.f32 %v1025, %v1245
      %v1247 = vpop.f32.mrb[0].mxu0
      %1248 = vmatprep.mubr.bf16.mxu0 0
      %1249 = vmatmul.mubr.bf16.gmra.mrb[0].mxu0 %v1094
      %v1250 = vpop.f32.mrb[0].mxu0
      %v1251 = vadd.f32 %v1030, %v1250
      %v1252 = vpop.f32.mrb[0].mxu0
      %v1253 = vpop.f32.mrb[0].mxu0
      %v1254 = vadd.f32 %v1033, %v1253
      %v1255 = vpop.f32.mrb[0].mxu0
      %1256 = vdwg.mxu0
      %v1257 = vld [vmem:[%s605] sm:$0xff]
      %v1258 = vld [vmem:[%s605 + $0x8] sm:$0xff]
      %v1259 = vld [vmem:[%s605 + $0x10] sm:$0xff]
      %v1260 = vld [vmem:[%s605 + $0x18] sm:$0xff]
      %v1261 = vld [vmem:[%s605 + $0x20] sm:$0xff]
      %v1262 = vld [vmem:[%s605 + $0x28] sm:$0xff]
      %v1263 = vld [vmem:[%s605 + $0x30] sm:$0xff]
      %v1264 = vld [vmem:[%s605 + $0x38] sm:$0xff]
      %v1265 = vld [vmem:[%s605 + $0x40] sm:$0xff]
      %v1266 = vld [vmem:[%s605 + $0x48] sm:$0xff]
      %v1267 = vld [vmem:[%s605 + $0x50] sm:$0xff]
      %v1268 = vld [vmem:[%s605 + $0x58] sm:$0xff]
      %v1269 = vld [vmem:[%s605 + $0x60] sm:$0xff]
      %v1270 = vld [vmem:[%s605 + $0x68] sm:$0xff]
      %v1271 = vld [vmem:[%s605 + $0x70] sm:$0xff]
      %v1272 = vld [vmem:[%s605 + $0x78] sm:$0xff]
      %v1273 = vld [vmem:[%s605 + $0x80] sm:$0xff]
      %v1274 = vld [vmem:[%s605 + $0x88] sm:$0xff]
      %v1275 = vld [vmem:[%s605 + $0x90] sm:$0xff]
      %v1276 = vld [vmem:[%s605 + $0x98] sm:$0xff]
      %v1277 = vld [vmem:[%s605 + $0xa0] sm:$0xff]
      %v1278 = vld [vmem:[%s605 + $0xa8] sm:$0xff]
      %v1279 = vld [vmem:[%s605 + $0xb0] sm:$0xff]
      %v1280 = vld [vmem:[%s605 + $0xb8] sm:$0xff]
      %v1281 = vld [vmem:[%s605 + $0xc0] sm:$0xff]
      %v1282 = vld [vmem:[%s605 + $0xc8] sm:$0xff]
      %v1283 = vld [vmem:[%s605 + $0xd0] sm:$0xff]
      %v1284 = vld [vmem:[%s605 + $0xd8] sm:$0xff]
      %v1285 = vld [vmem:[%s605 + $0xe0] sm:$0xff]
      %v1286 = vld [vmem:[%s605 + $0xe8] sm:$0xff]
      %v1287 = vld [vmem:[%s605 + $0xf0] sm:$0xff]
      %v1288 = vld [vmem:[%s605 + $0xf8] sm:$0xff]
      %v1289 = vld [vmem:[%s7] sm:$0xf]
      %v1290 = vld [vmem:[%s7 + $0x4] sm:$0xf]
      %v1291 = vld [vmem:[%s7 + $0x8] sm:$0xf]
      %v1292 = vld [vmem:[%s7 + $0xc] sm:$0xf]
      %v1293 = vld [vmem:[%s7 + $0x10] sm:$0xf]
      %v1294 = vld [vmem:[%s7 + $0x14] sm:$0xf]
      %v1295 = vld [vmem:[%s7 + $0x18] sm:$0xf]
      %v1296 = vld [vmem:[%s7 + $0x1c] sm:$0xf]
      %v1297 = vpack.c.bf16 %v1258, %v1257
      %v1298 = vpack.c.bf16 %v1260, %v1259
      %v1299 = vpack.c.bf16 %v1262, %v1261
      %v1300 = vpack.c.bf16 %v1264, %v1263
      %v1301 = vpack.c.bf16 %v1266, %v1265
      %v1302 = vpack.c.bf16 %v1268, %v1267
      %v1303 = vpack.c.bf16 %v1270, %v1269
      %v1304 = vpack.c.bf16 %v1272, %v1271
      %v1305 = vpack.c.bf16 %v1274, %v1273
      %v1306 = vpack.c.bf16 %v1276, %v1275
      %v1307 = vpack.c.bf16 %v1278, %v1277
      %v1308 = vpack.c.bf16 %v1280, %v1279
      %v1309 = vpack.c.bf16 %v1282, %v1281
      %v1310 = vpack.c.bf16 %v1284, %v1283
      %v1311 = vpack.c.bf16 %v1286, %v1285
      %v1312 = vpack.c.bf16 %v1288, %v1287
      %v1321 = vunpack.c.l.b16 %v1289
      %v1322 = vunpack.c.l.b16 %v1290
      %v1323 = vunpack.c.l.b16 %v1291
      %v1324 = vunpack.c.l.b16 %v1292
      %v1325 = vunpack.c.l.b16 %v1293
      %v1326 = vunpack.c.l.b16 %v1294
      %v1327 = vunpack.c.l.b16 %v1295
      %v1328 = vunpack.c.l.b16 %v1296
      %v1329 = vpack.c.b16 %v1322, %v1321
      %v1330 = vpack.c.b16 %v1324, %v1323
      %v1331 = vpack.c.b16 %v1326, %v1325
      %v1332 = vpack.c.b16 %v1328, %v1327
      %vm1337 = vcmask 523264
      %v1339 = vsel %vm1337, %v1297, 0
      %v1342 = vsel %vm1337, %v1298, 0
      %v1345 = vsel %vm1337, %v1299, 0
      %v1348 = vsel %vm1337, %v1300, 0
      %v1351 = vsel %vm1337, %v1301, 0
      %v1354 = vsel %vm1337, %v1302, 0
      %v1357 = vsel %vm1337, %v1303, 0
      %v1360 = vsel %vm1337, %v1304, 0
      %v1363 = vsel %vm1337, %v1305, 0
      %v1366 = vsel %vm1337, %v1306, 0
      %v1369 = vsel %vm1337, %v1307, 0
      %v1372 = vsel %vm1337, %v1308, 0
      %v1375 = vsel %vm1337, %v1309, 0
      %v1378 = vsel %vm1337, %v1310, 0
      %v1381 = vsel %vm1337, %v1311, 0
      %v1384 = vsel %vm1337, %v1312, 0
      %1386 = vmatprep.subr.bf16.mxu0 0
      %1387 = vmatpush1.bf16.msra.mxu0 %v1329
      %1388 = vmatprep.subr.bf16.mxu0 0
      %1389 = vmatpush1.bf16.msra.mxu0 %v1330
      %1390 = vmatprep.subr.bf16.mxu0 0
      %1391 = vmatpush1.bf16.msra.mxu0 %v1331
      %1392 = vmatprep.subr.bf16.mxu0 0
      %1393 = vmatpush1.bf16.msra.mxu0 %v1332
      %1394 = vmatprep.subr.bf16.mxu0 0
      %1395 = vmatpush1.bf16.msra.mxu0 0
      %1396 = vmatprep.subr.bf16.mxu0 0
      %1397 = vmatpush1.bf16.msra.mxu0 0
      %1398 = vmatprep.subr.bf16.mxu0 0
      %1399 = vmatpush1.bf16.msra.mxu0 0
      %1400 = vmatprep.subr.bf16.mxu0 0
      %1401 = vmatpush1.bf16.msra.mxu0 0
      %1402 = vmatprep.subr.bf16.mxu0 0
      %1403 = vmatpush1.bf16.msra.mxu0 0
      %1404 = vmatprep.subr.bf16.mxu0 0
      %1405 = vmatpush1.bf16.msra.mxu0 0
      %1406 = vmatprep.subr.bf16.mxu0 0
      %1407 = vmatpush1.bf16.msra.mxu0 0
      %1408 = vmatprep.subr.bf16.mxu0 0
      %1409 = vmatpush1.bf16.msra.mxu0 0
      %1410 = vmatprep.subr.bf16.mxu0 0
      %1411 = vmatpush1.bf16.msra.mxu0 0
      %1412 = vmatprep.subr.bf16.mxu0 0
      %1413 = vmatpush1.bf16.msra.mxu0 0
      %1414 = vmatprep.subr.bf16.mxu0 0
      %1415 = vmatpush1.bf16.msra.mxu0 0
      %1416 = vmatprep.subr.bf16.mxu0 0
      %1417 = vmatpush1.bf16.msra.mxu0 0
      %1418 = vmatprep.mubr.bf16.mxu0 0
      %1419 = vmatmul.mubr.bf16.gmra.mrb[0].mxu0 %v1339
      %v1420 = vpop.f32.mrb[0].mxu0
      %v1421 = vadd.f32 0.0, %v1420
      %v1422 = vpop.f32.mrb[0].mxu0
      %v1423 = vpop.f32.mrb[0].mxu0
      %v1424 = vadd.f32 0.0, %v1423
      %v1425 = vpop.f32.mrb[0].mxu0
      %1426 = vmatprep.mubr.bf16.mxu0 0
      %1427 = vmatmul.mubr.bf16.gmra.mrb[0].mxu0 %v1342
      %v1428 = vpop.f32.mrb[0].mxu0
      %v1429 = vadd.f32 0.0, %v1428
      %v1430 = vpop.f32.mrb[0].mxu0
      %v1431 = vpop.f32.mrb[0].mxu0
      %v1432 = vadd.f32 0.0, %v1431
      %v1433 = vpop.f32.mrb[0].mxu0
      %1434 = vmatprep.mubr.bf16.mxu0 0
      %1435 = vmatmul.mubr.bf16.gmra.mrb[0].mxu0 %v1345
      %v1436 = vpop.f32.mrb[0].mxu0
      %v1437 = vadd.f32 0.0, %v1436
      %v1438 = vpop.f32.mrb[0].mxu0
      %v1439 = vpop.f32.mrb[0].mxu0
      %v1440 = vadd.f32 0.0, %v1439
      %v1441 = vpop.f32.mrb[0].mxu0
      %1442 = vmatprep.mubr.bf16.mxu0 0
      %1443 = vmatmul.mubr.bf16.gmra.mrb[0].mxu0 %v1348
      %v1444 = vpop.f32.mrb[0].mxu0
      %v1445 = vadd.f32 0.0, %v1444
      %v1446 = vpop.f32.mrb[0].mxu0
      %v1447 = vpop.f32.mrb[0].mxu0
      %v1448 = vadd.f32 0.0, %v1447
      %v1449 = vpop.f32.mrb[0].mxu0
      %1450 = vmatprep.mubr.bf16.mxu0 0
      %1451 = vmatmul.mubr.bf16.gmra.mrb[0].mxu0 %v1351
      %v1452 = vpop.f32.mrb[0].mxu0
      %v1453 = vadd.f32 0.0, %v1452
      %v1454 = vpop.f32.mrb[0].mxu0
      %v1455 = vpop.f32.mrb[0].mxu0
      %v1456 = vadd.f32 0.0, %v1455
      %v1457 = vpop.f32.mrb[0].mxu0
      %1458 = vmatprep.mubr.bf16.mxu0 0
      %1459 = vmatmul.mubr.bf16.gmra.mrb[0].mxu0 %v1354
      %v1460 = vpop.f32.mrb[0].mxu0
      %v1461 = vadd.f32 0.0, %v1460
      %v1462 = vpop.f32.mrb[0].mxu0
      %v1463 = vpop.f32.mrb[0].mxu0
      %v1464 = vadd.f32 0.0, %v1463
      %v1465 = vpop.f32.mrb[0].mxu0
      %1466 = vmatprep.mubr.bf16.mxu0 0
      %1467 = vmatmul.mubr.bf16.gmra.mrb[0].mxu0 %v1357
      %v1468 = vpop.f32.mrb[0].mxu0
      %v1469 = vadd.f32 0.0, %v1468
      %v1470 = vpop.f32.mrb[0].mxu0
      %v1471 = vpop.f32.mrb[0].mxu0
      %v1472 = vadd.f32 0.0, %v1471
      %v1473 = vpop.f32.mrb[0].mxu0
      %1474 = vmatprep.mubr.bf16.mxu0 0
      %1475 = vmatmul.mubr.bf16.gmra.mrb[0].mxu0 %v1360
      %v1476 = vpop.f32.mrb[0].mxu0
      %v1477 = vadd.f32 0.0, %v1476
      %v1478 = vpop.f32.mrb[0].mxu0
      %v1479 = vpop.f32.mrb[0].mxu0
      %v1480 = vadd.f32 0.0, %v1479
      %v1481 = vpop.f32.mrb[0].mxu0
      %1482 = vmatprep.mubr.bf16.mxu0 0
      %1483 = vmatmul.mubr.bf16.gmra.mrb[0].mxu0 %v1363
      %v1484 = vpop.f32.mrb[0].mxu0
      %v1485 = vadd.f32 0.0, %v1484
      %v1486 = vpop.f32.mrb[0].mxu0
      %v1487 = vpop.f32.mrb[0].mxu0
      %v1488 = vadd.f32 0.0, %v1487
      %v1489 = vpop.f32.mrb[0].mxu0
      %1490 = vmatprep.mubr.bf16.mxu0 0
      %1491 = vmatmul.mubr.bf16.gmra.mrb[0].mxu0 %v1366
      %v1492 = vpop.f32.mrb[0].mxu0
      %v1493 = vadd.f32 0.0, %v1492
      %v1494 = vpop.f32.mrb[0].mxu0
      %v1495 = vpop.f32.mrb[0].mxu0
      %v1496 = vadd.f32 0.0, %v1495
      %v1497 = vpop.f32.mrb[0].mxu0
      %1498 = vmatprep.mubr.bf16.mxu0 0
      %1499 = vmatmul.mubr.bf16.gmra.mrb[0].mxu0 %v1369
      %v1500 = vpop.f32.mrb[0].mxu0
      %v1501 = vadd.f32 0.0, %v1500
      %v1502 = vpop.f32.mrb[0].mxu0
      %v1503 = vpop.f32.mrb[0].mxu0
      %v1504 = vadd.f32 0.0, %v1503
      %v1505 = vpop.f32.mrb[0].mxu0
      %1506 = vmatprep.mubr.bf16.mxu0 0
      %1507 = vmatmul.mubr.bf16.gmra.mrb[0].mxu0 %v1372
      %v1508 = vpop.f32.mrb[0].mxu0
      %v1509 = vadd.f32 0.0, %v1508
      %v1510 = vpop.f32.mrb[0].mxu0
      %v1511 = vpop.f32.mrb[0].mxu0
      %v1512 = vadd.f32 0.0, %v1511
      %v1513 = vpop.f32.mrb[0].mxu0
      %1514 = vmatprep.mubr.bf16.mxu0 0
      %1515 = vmatmul.mubr.bf16.gmra.mrb[0].mxu0 %v1375
      %v1516 = vpop.f32.mrb[0].mxu0
      %v1517 = vadd.f32 0.0, %v1516
      %v1518 = vpop.f32.mrb[0].mxu0
      %v1519 = vpop.f32.mrb[0].mxu0
      %v1520 = vadd.f32 0.0, %v1519
      %v1521 = vpop.f32.mrb[0].mxu0
      %1522 = vmatprep.mubr.bf16.mxu0 0
      %1523 = vmatmul.mubr.bf16.gmra.mrb[0].mxu0 %v1378
      %v1524 = vpop.f32.mrb[0].mxu0
      %v1525 = vadd.f32 0.0, %v1524
      %v1526 = vpop.f32.mrb[0].mxu0
      %v1527 = vpop.f32.mrb[0].mxu0
      %v1528 = vadd.f32 0.0, %v1527
      %v1529 = vpop.f32.mrb[0].mxu0
      %1530 = vmatprep.mubr.bf16.mxu0 0
      %1531 = vmatmul.mubr.bf16.gmra.mrb[0].mxu0 %v1381
      %v1532 = vpop.f32.mrb[0].mxu0
      %v1533 = vadd.f32 0.0, %v1532
      %v1534 = vpop.f32.mrb[0].mxu0
      %v1535 = vpop.f32.mrb[0].mxu0
      %v1536 = vadd.f32 0.0, %v1535
      %v1537 = vpop.f32.mrb[0].mxu0
      %1538 = vmatprep.mubr.bf16.mxu0 0
      %1539 = vmatmul.mubr.bf16.gmra.mrb[0].mxu0 %v1384
      %v1540 = vpop.f32.mrb[0].mxu0
      %v1541 = vadd.f32 0.0, %v1540
      %v1542 = vpop.f32.mrb[0].mxu0
      %v1543 = vpop.f32.mrb[0].mxu0
      %v1544 = vadd.f32 0.0, %v1543
      %v1545 = vpop.f32.mrb[0].mxu0
      %1546 = vdwg.mxu0
      %v1547 = vadd.f32 %v1131, %v1421
      %v1548 = vadd.f32 %v1134, %v1424
      %v1549 = vadd.f32 %v1139, %v1429
      %v1550 = vadd.f32 %v1142, %v1432
      %v1551 = vadd.f32 %v1147, %v1437
      %v1552 = vadd.f32 %v1150, %v1440
      %v1553 = vadd.f32 %v1155, %v1445
      %v1554 = vadd.f32 %v1158, %v1448
      %v1555 = vadd.f32 %v1163, %v1453
      %v1556 = vadd.f32 %v1166, %v1456
      %v1557 = vadd.f32 %v1171, %v1461
      %v1558 = vadd.f32 %v1174, %v1464
      %v1559 = vadd.f32 %v1179, %v1469
      %v1560 = vadd.f32 %v1182, %v1472
      %v1561 = vadd.f32 %v1187, %v1477
      %v1562 = vadd.f32 %v1190, %v1480
      %v1563 = vadd.f32 %v1195, %v1485
      %v1564 = vadd.f32 %v1198, %v1488
      %v1565 = vadd.f32 %v1203, %v1493
      %v1566 = vadd.f32 %v1206, %v1496
      %v1567 = vadd.f32 %v1211, %v1501
      %v1568 = vadd.f32 %v1214, %v1504
      %v1569 = vadd.f32 %v1219, %v1509
      %v1570 = vadd.f32 %v1222, %v1512
      %v1571 = vadd.f32 %v1227, %v1517
      %v1572 = vadd.f32 %v1230, %v1520
      %v1573 = vadd.f32 %v1235, %v1525
      %v1574 = vadd.f32 %v1238, %v1528
      %v1575 = vadd.f32 %v1243, %v1533
      %v1576 = vadd.f32 %v1246, %v1536
      %v1577 = vadd.f32 %v1251, %v1541
      %v1578 = vadd.f32 %v1254, %v1544
      %v1579 = vld [vmem:[%s8] sm:$0x1]
      %v1581 = vlaneseq
      %v1582 = vshrl.u32 %v1581, 7
      %v1583 = vsub.s32 0, %v1582
      %v1584 = vrot.slane %v1579, %v1583
      %v1586 = vadd.f32 %v1547, %v1584
      %v1587 = vadd.f32 %v1548, %v1584
      %v1588 = vadd.f32 %v1549, %v1584
      %v1589 = vadd.f32 %v1550, %v1584
      %v1590 = vadd.f32 %v1551, %v1584
      %v1591 = vadd.f32 %v1552, %v1584
      %v1592 = vadd.f32 %v1553, %v1584
      %v1593 = vadd.f32 %v1554, %v1584
      %v1594 = vadd.f32 %v1555, %v1584
      %v1595 = vadd.f32 %v1556, %v1584
      %v1596 = vadd.f32 %v1557, %v1584
      %v1597 = vadd.f32 %v1558, %v1584
      %v1598 = vadd.f32 %v1559, %v1584
      %v1599 = vadd.f32 %v1560, %v1584
      %v1600 = vadd.f32 %v1561, %v1584
      %v1601 = vadd.f32 %v1562, %v1584
      %v1602 = vadd.f32 %v1563, %v1584
      %v1603 = vadd.f32 %v1564, %v1584
      %v1604 = vadd.f32 %v1565, %v1584
      %v1605 = vadd.f32 %v1566, %v1584
      %v1606 = vadd.f32 %v1567, %v1584
      %v1607 = vadd.f32 %v1568, %v1584
      %v1608 = vadd.f32 %v1569, %v1584
      %v1609 = vadd.f32 %v1570, %v1584
      %v1610 = vadd.f32 %v1571, %v1584
      %v1611 = vadd.f32 %v1572, %v1584
      %v1612 = vadd.f32 %v1573, %v1584
      %v1613 = vadd.f32 %v1574, %v1584
      %v1614 = vadd.f32 %v1575, %v1584
      %v1615 = vadd.f32 %v1576, %v1584
      %v1616 = vadd.f32 %v1577, %v1584
      %v1617 = vadd.f32 %v1578, %v1584
      %v1618 = vmax.f32 %v1586, 0.0
      %v1619 = vmax.f32 %v1587, 0.0
      %v1620 = vmax.f32 %v1588, 0.0
      %v1621 = vmax.f32 %v1589, 0.0
      %v1622 = vmax.f32 %v1590, 0.0
      %v1623 = vmax.f32 %v1591, 0.0
      %v1624 = vmax.f32 %v1592, 0.0
      %v1625 = vmax.f32 %v1593, 0.0
      %v1626 = vmax.f32 %v1594, 0.0
      %v1627 = vmax.f32 %v1595, 0.0
      %v1628 = vmax.f32 %v1596, 0.0
      %v1629 = vmax.f32 %v1597, 0.0
      %v1630 = vmax.f32 %v1598, 0.0
      %v1631 = vmax.f32 %v1599, 0.0
      %v1632 = vmax.f32 %v1600, 0.0
      %v1633 = vmax.f32 %v1601, 0.0
      %v1634 = vmax.f32 %v1602, 0.0
      %v1635 = vmax.f32 %v1603, 0.0
      %v1636 = vmax.f32 %v1604, 0.0
      %v1637 = vmax.f32 %v1605, 0.0
      %v1638 = vmax.f32 %v1606, 0.0
      %v1639 = vmax.f32 %v1607, 0.0
      %v1640 = vmax.f32 %v1608, 0.0
      %v1641 = vmax.f32 %v1609, 0.0
      %v1642 = vmax.f32 %v1610, 0.0
      %v1643 = vmax.f32 %v1611, 0.0
      %v1644 = vmax.f32 %v1612, 0.0
      %v1645 = vmax.f32 %v1613, 0.0
      %v1646 = vmax.f32 %v1614, 0.0
      %v1647 = vmax.f32 %v1615, 0.0
      %v1648 = vmax.f32 %v1616, 0.0
      %v1649 = vmax.f32 %v1617, 0.0
      %v1650 = vld [vmem:[%s9] sm:$0xf]
      %v1651 = vld [vmem:[%s9 + $0x4] sm:$0xf]
      %v1652 = vld [vmem:[%s9 + $0x8] sm:$0xf]
      %v1653 = vld [vmem:[%s9 + $0xc] sm:$0xf]
      %v1654 = vld [vmem:[%s9 + $0x10] sm:$0xf]
      %v1655 = vld [vmem:[%s9 + $0x14] sm:$0xf]
      %v1656 = vld [vmem:[%s9 + $0x18] sm:$0xf]
      %v1657 = vld [vmem:[%s9 + $0x1c] sm:$0xf]
      %v1658 = vld [vmem:[%s9 + $0x20] sm:$0xf]
      %v1659 = vld [vmem:[%s9 + $0x24] sm:$0xf]
      %v1660 = vld [vmem:[%s9 + $0x28] sm:$0xf]
      %v1661 = vld [vmem:[%s9 + $0x2c] sm:$0xf]
      %v1662 = vld [vmem:[%s9 + $0x30] sm:$0xf]
      %v1663 = vld [vmem:[%s9 + $0x34] sm:$0xf]
      %v1664 = vld [vmem:[%s9 + $0x38] sm:$0xf]
      %v1665 = vld [vmem:[%s9 + $0x3c] sm:$0xf]
      %v1666 = vpack.c.bf16 %v1619, %v1618
      %v1667 = vpack.c.bf16 %v1621, %v1620
      %v1668 = vpack.c.bf16 %v1623, %v1622
      %v1669 = vpack.c.bf16 %v1625, %v1624
      %v1670 = vpack.c.bf16 %v1627, %v1626
      %v1671 = vpack.c.bf16 %v1629, %v1628
      %v1672 = vpack.c.bf16 %v1631, %v1630
      %v1673 = vpack.c.bf16 %v1633, %v1632
      %v1674 = vpack.c.bf16 %v1635, %v1634
      %v1675 = vpack.c.bf16 %v1637, %v1636
      %v1676 = vpack.c.bf16 %v1639, %v1638
      %v1677 = vpack.c.bf16 %v1641, %v1640
      %v1678 = vpack.c.bf16 %v1643, %v1642
      %v1679 = vpack.c.bf16 %v1645, %v1644
      %v1680 = vpack.c.bf16 %v1647, %v1646
      %v1681 = vpack.c.bf16 %v1649, %v1648
      %v1682 = vld [vmem:[%s10] sm:$0x1]
      %v1684 = vlaneseq
      %v1685 = vshrl.u32 %v1684, 7
      %v1686 = vsub.s32 0, %v1685
      %v1687 = vrot.slane %v1682, %v1686
      %v1705 = vunpack.c.l.b16 %v1650
      %v1706 = vunpack.c.l.b16 %v1651
      %v1707 = vunpack.c.l.b16 %v1652
      %v1708 = vunpack.c.l.b16 %v1653
      %v1709 = vunpack.c.l.b16 %v1654
      %v1710 = vunpack.c.l.b16 %v1655
      %v1711 = vunpack.c.l.b16 %v1656
      %v1712 = vunpack.c.l.b16 %v1657
      %v1713 = vunpack.c.l.b16 %v1658
      %v1714 = vunpack.c.l.b16 %v1659
      %v1715 = vunpack.c.l.b16 %v1660
      %v1716 = vunpack.c.l.b16 %v1661
      %v1717 = vunpack.c.l.b16 %v1662
      %v1718 = vunpack.c.l.b16 %v1663
      %v1719 = vunpack.c.l.b16 %v1664
      %v1720 = vunpack.c.l.b16 %v1665
      %v1721 = vpack.c.b16 %v1706, %v1705
      %v1722 = vpack.c.b16 %v1708, %v1707
      %v1723 = vpack.c.b16 %v1710, %v1709
      %v1724 = vpack.c.b16 %v1712, %v1711
      %v1725 = vpack.c.b16 %v1714, %v1713
      %v1726 = vpack.c.b16 %v1716, %v1715
      %v1727 = vpack.c.b16 %v1718, %v1717
      %v1728 = vpack.c.b16 %v1720, %v1719
      %1737 = vmatprep.subr.bf16.mxu0 0
      %1738 = vmatpush1.bf16.msra.mxu0 %v1721
      %1739 = vmatprep.subr.bf16.mxu0 0
      %1740 = vmatpush1.bf16.msra.mxu0 %v1722
      %1741 = vmatprep.subr.bf16.mxu0 0
      %1742 = vmatpush1.bf16.msra.mxu0 %v1723
      %1743 = vmatprep.subr.bf16.mxu0 0
      %1744 = vmatpush1.bf16.msra.mxu0 %v1724
      %1745 = vmatprep.subr.bf16.mxu0 0
      %1746 = vmatpush1.bf16.msra.mxu0 %v1725
      %1747 = vmatprep.subr.bf16.mxu0 0
      %1748 = vmatpush1.bf16.msra.mxu0 %v1726
      %1749 = vmatprep.subr.bf16.mxu0 0
      %1750 = vmatpush1.bf16.msra.mxu0 %v1727
      %1751 = vmatprep.subr.bf16.mxu0 0
      %1752 = vmatpush1.bf16.msra.mxu0 %v1728
      %1753 = vmatprep.subr.bf16.mxu0 0
      %1754 = vmatpush1.bf16.msra.mxu0 0
      %1755 = vmatprep.subr.bf16.mxu0 0
      %1756 = vmatpush1.bf16.msra.mxu0 0
      %1757 = vmatprep.subr.bf16.mxu0 0
      %1758 = vmatpush1.bf16.msra.mxu0 0
      %1759 = vmatprep.subr.bf16.mxu0 0
      %1760 = vmatpush1.bf16.msra.mxu0 0
      %1761 = vmatprep.subr.bf16.mxu0 0
      %1762 = vmatpush1.bf16.msra.mxu0 0
      %1763 = vmatprep.subr.bf16.mxu0 0
      %1764 = vmatpush1.bf16.msra.mxu0 0
      %1765 = vmatprep.subr.bf16.mxu0 0
      %1766 = vmatpush1.bf16.msra.mxu0 0
      %1767 = vmatprep.subr.bf16.mxu0 0
      %1768 = vmatpush1.bf16.msra.mxu0 0
      %1769 = vmatprep.mubr.bf16.mxu0 0
      %1770 = vmatmul.mubr.bf16.gmra.mrb[0].mxu0 %v1666
      %v1771 = vpop.f32.mrb[0].mxu0
      %v1772 = vadd.f32 %v1687, %v1771
      %v1773 = vpop.f32.mrb[0].mxu0
      %v1774 = vpop.f32.mrb[0].mxu0
      %v1775 = vadd.f32 %v1687, %v1774
      %v1776 = vpop.f32.mrb[0].mxu0
      %1777 = vmatprep.mubr.bf16.mxu0 0
      %1778 = vmatmul.mubr.bf16.gmra.mrb[0].mxu0 %v1667
      %v1779 = vpop.f32.mrb[0].mxu0
      %v1780 = vadd.f32 %v1687, %v1779
      %v1781 = vpop.f32.mrb[0].mxu0
      %v1782 = vpop.f32.mrb[0].mxu0
      %v1783 = vadd.f32 %v1687, %v1782
      %v1784 = vpop.f32.mrb[0].mxu0
      %1785 = vmatprep.mubr.bf16.mxu0 0
      %1786 = vmatmul.mubr.bf16.gmra.mrb[0].mxu0 %v1668
      %v1787 = vpop.f32.mrb[0].mxu0
      %v1788 = vadd.f32 %v1687, %v1787
      %v1789 = vpop.f32.mrb[0].mxu0
      %v1790 = vpop.f32.mrb[0].mxu0
      %v1791 = vadd.f32 %v1687, %v1790
      %v1792 = vpop.f32.mrb[0].mxu0
      %1793 = vmatprep.mubr.bf16.mxu0 0
      %1794 = vmatmul.mubr.bf16.gmra.mrb[0].mxu0 %v1669
      %v1795 = vpop.f32.mrb[0].mxu0
      %v1796 = vadd.f32 %v1687, %v1795
      %v1797 = vpop.f32.mrb[0].mxu0
      %v1798 = vpop.f32.mrb[0].mxu0
      %v1799 = vadd.f32 %v1687, %v1798
      %v1800 = vpop.f32.mrb[0].mxu0
      %1801 = vmatprep.mubr.bf16.mxu0 0
      %1802 = vmatmul.mubr.bf16.gmra.mrb[0].mxu0 %v1670
      %v1803 = vpop.f32.mrb[0].mxu0
      %v1804 = vadd.f32 %v1687, %v1803
      %v1805 = vpop.f32.mrb[0].mxu0
      %v1806 = vpop.f32.mrb[0].mxu0
      %v1807 = vadd.f32 %v1687, %v1806
      %v1808 = vpop.f32.mrb[0].mxu0
      %1809 = vmatprep.mubr.bf16.mxu0 0
      %1810 = vmatmul.mubr.bf16.gmra.mrb[0].mxu0 %v1671
      %v1811 = vpop.f32.mrb[0].mxu0
      %v1812 = vadd.f32 %v1687, %v1811
      %v1813 = vpop.f32.mrb[0].mxu0
      %v1814 = vpop.f32.mrb[0].mxu0
      %v1815 = vadd.f32 %v1687, %v1814
      %v1816 = vpop.f32.mrb[0].mxu0
      %1817 = vmatprep.mubr.bf16.mxu0 0
      %1818 = vmatmul.mubr.bf16.gmra.mrb[0].mxu0 %v1672
      %v1819 = vpop.f32.mrb[0].mxu0
      %v1820 = vadd.f32 %v1687, %v1819
      %v1821 = vpop.f32.mrb[0].mxu0
      %v1822 = vpop.f32.mrb[0].mxu0
      %v1823 = vadd.f32 %v1687, %v1822
      %v1824 = vpop.f32.mrb[0].mxu0
      %1825 = vmatprep.mubr.bf16.mxu0 0
      %1826 = vmatmul.mubr.bf16.gmra.mrb[0].mxu0 %v1673
      %v1827 = vpop.f32.mrb[0].mxu0
      %v1828 = vadd.f32 %v1687, %v1827
      %v1829 = vpop.f32.mrb[0].mxu0
      %v1830 = vpop.f32.mrb[0].mxu0
      %v1831 = vadd.f32 %v1687, %v1830
      %v1832 = vpop.f32.mrb[0].mxu0
      %1833 = vmatprep.mubr.bf16.mxu0 0
      %1834 = vmatmul.mubr.bf16.gmra.mrb[0].mxu0 %v1674
      %v1835 = vpop.f32.mrb[0].mxu0
      %v1836 = vadd.f32 %v1687, %v1835
      %v1837 = vpop.f32.mrb[0].mxu0
      %v1838 = vpop.f32.mrb[0].mxu0
      %v1839 = vadd.f32 %v1687, %v1838
      %v1840 = vpop.f32.mrb[0].mxu0
      %1841 = vmatprep.mubr.bf16.mxu0 0
      %1842 = vmatmul.mubr.bf16.gmra.mrb[0].mxu0 %v1675
      %v1843 = vpop.f32.mrb[0].mxu0
      %v1844 = vadd.f32 %v1687, %v1843
      %v1845 = vpop.f32.mrb[0].mxu0
      %v1846 = vpop.f32.mrb[0].mxu0
      %v1847 = vadd.f32 %v1687, %v1846
      %v1848 = vpop.f32.mrb[0].mxu0
      %1849 = vmatprep.mubr.bf16.mxu0 0
      %1850 = vmatmul.mubr.bf16.gmra.mrb[0].mxu0 %v1676
      %v1851 = vpop.f32.mrb[0].mxu0
      %v1852 = vadd.f32 %v1687, %v1851
      %v1853 = vpop.f32.mrb[0].mxu0
      %v1854 = vpop.f32.mrb[0].mxu0
      %v1855 = vadd.f32 %v1687, %v1854
      %v1856 = vpop.f32.mrb[0].mxu0
      %1857 = vmatprep.mubr.bf16.mxu0 0
      %1858 = vmatmul.mubr.bf16.gmra.mrb[0].mxu0 %v1677
      %v1859 = vpop.f32.mrb[0].mxu0
      %v1860 = vadd.f32 %v1687, %v1859
      %v1861 = vpop.f32.mrb[0].mxu0
      %v1862 = vpop.f32.mrb[0].mxu0
      %v1863 = vadd.f32 %v1687, %v1862
      %v1864 = vpop.f32.mrb[0].mxu0
      %1865 = vmatprep.mubr.bf16.mxu0 0
      %1866 = vmatmul.mubr.bf16.gmra.mrb[0].mxu0 %v1678
      %v1867 = vpop.f32.mrb[0].mxu0
      %v1868 = vadd.f32 %v1687, %v1867
      %v1869 = vpop.f32.mrb[0].mxu0
      %v1870 = vpop.f32.mrb[0].mxu0
      %v1871 = vadd.f32 %v1687, %v1870
      %v1872 = vpop.f32.mrb[0].mxu0
      %1873 = vmatprep.mubr.bf16.mxu0 0
      %1874 = vmatmul.mubr.bf16.gmra.mrb[0].mxu0 %v1679
      %v1875 = vpop.f32.mrb[0].mxu0
      %v1876 = vadd.f32 %v1687, %v1875
      %v1877 = vpop.f32.mrb[0].mxu0
      %v1878 = vpop.f32.mrb[0].mxu0
      %v1879 = vadd.f32 %v1687, %v1878
      %v1880 = vpop.f32.mrb[0].mxu0
      %1881 = vmatprep.mubr.bf16.mxu0 0
      %1882 = vmatmul.mubr.bf16.gmra.mrb[0].mxu0 %v1680
      %v1883 = vpop.f32.mrb[0].mxu0
      %v1884 = vadd.f32 %v1687, %v1883
      %v1885 = vpop.f32.mrb[0].mxu0
      %v1886 = vpop.f32.mrb[0].mxu0
      %v1887 = vadd.f32 %v1687, %v1886
      %v1888 = vpop.f32.mrb[0].mxu0
      %1889 = vmatprep.mubr.bf16.mxu0 0
      %1890 = vmatmul.mubr.bf16.gmra.mrb[0].mxu0 %v1681
      %v1891 = vpop.f32.mrb[0].mxu0
      %v1892 = vadd.f32 %v1687, %v1891
      %v1893 = vpop.f32.mrb[0].mxu0
      %v1894 = vpop.f32.mrb[0].mxu0
      %v1895 = vadd.f32 %v1687, %v1894
      %v1896 = vpop.f32.mrb[0].mxu0
      %1897 = vdwg.mxu0
      %v1898 = vmax.f32 %v1772, 0.0
      %v1899 = vmax.f32 %v1775, 0.0
      %v1900 = vmax.f32 %v1780, 0.0
      %v1901 = vmax.f32 %v1783, 0.0
      %v1902 = vmax.f32 %v1788, 0.0
      %v1903 = vmax.f32 %v1791, 0.0
      %v1904 = vmax.f32 %v1796, 0.0
      %v1905 = vmax.f32 %v1799, 0.0
      %v1906 = vmax.f32 %v1804, 0.0
      %v1907 = vmax.f32 %v1807, 0.0
      %v1908 = vmax.f32 %v1812, 0.0
      %v1909 = vmax.f32 %v1815, 0.0
      %v1910 = vmax.f32 %v1820, 0.0
      %v1911 = vmax.f32 %v1823, 0.0
      %v1912 = vmax.f32 %v1828, 0.0
      %v1913 = vmax.f32 %v1831, 0.0
      %v1914 = vmax.f32 %v1836, 0.0
      %v1915 = vmax.f32 %v1839, 0.0
      %v1916 = vmax.f32 %v1844, 0.0
      %v1917 = vmax.f32 %v1847, 0.0
      %v1918 = vmax.f32 %v1852, 0.0
      %v1919 = vmax.f32 %v1855, 0.0
      %v1920 = vmax.f32 %v1860, 0.0
      %v1921 = vmax.f32 %v1863, 0.0
      %v1922 = vmax.f32 %v1868, 0.0
      %v1923 = vmax.f32 %v1871, 0.0
      %v1924 = vmax.f32 %v1876, 0.0
      %v1925 = vmax.f32 %v1879, 0.0
      %v1926 = vmax.f32 %v1884, 0.0
      %v1927 = vmax.f32 %v1887, 0.0
      %v1928 = vmax.f32 %v1892, 0.0
      %v1929 = vmax.f32 %v1895, 0.0
      %v1930 = vld [vmem:[%s11] sm:$0xf]
      %v1931 = vld [vmem:[%s11 + $0x4] sm:$0xf]
      %v1932 = vld [vmem:[%s11 + $0x8] sm:$0xf]
      %v1933 = vld [vmem:[%s11 + $0xc] sm:$0xf]
      %v1934 = vld [vmem:[%s11 + $0x10] sm:$0xf]
      %v1935 = vld [vmem:[%s11 + $0x14] sm:$0xf]
      %v1936 = vld [vmem:[%s11 + $0x18] sm:$0xf]
      %v1937 = vld [vmem:[%s11 + $0x1c] sm:$0xf]
      %v1938 = vpack.c.bf16 %v1899, %v1898
      %v1939 = vpack.c.bf16 %v1901, %v1900
      %v1940 = vpack.c.bf16 %v1903, %v1902
      %v1941 = vpack.c.bf16 %v1905, %v1904
      %v1942 = vpack.c.bf16 %v1907, %v1906
      %v1943 = vpack.c.bf16 %v1909, %v1908
      %v1944 = vpack.c.bf16 %v1911, %v1910
      %v1945 = vpack.c.bf16 %v1913, %v1912
      %v1946 = vpack.c.bf16 %v1915, %v1914
      %v1947 = vpack.c.bf16 %v1917, %v1916
      %v1948 = vpack.c.bf16 %v1919, %v1918
      %v1949 = vpack.c.bf16 %v1921, %v1920
      %v1950 = vpack.c.bf16 %v1923, %v1922
      %v1951 = vpack.c.bf16 %v1925, %v1924
      %v1952 = vpack.c.bf16 %v1927, %v1926
      %v1953 = vpack.c.bf16 %v1929, %v1928
      %v1954 = vld [vmem:[%s12] sm:$0x1]
      %v1956 = vlaneseq
      %v1957 = vshrl.u32 %v1956, 7
      %v1958 = vsub.s32 0, %v1957
      %v1959 = vrot.slane %v1954, %v1958
      %v1969 = vunpack.c.l.b16 %v1930
      %v1970 = vunpack.c.l.b16 %v1931
      %v1971 = vunpack.c.l.b16 %v1932
      %v1972 = vunpack.c.l.b16 %v1933
      %v1973 = vunpack.c.l.b16 %v1934
      %v1974 = vunpack.c.l.b16 %v1935
      %v1975 = vunpack.c.l.b16 %v1936
      %v1976 = vunpack.c.l.b16 %v1937
      %v1977 = vpack.c.b16 %v1970, %v1969
      %v1978 = vpack.c.b16 %v1972, %v1971
      %v1979 = vpack.c.b16 %v1974, %v1973
      %v1980 = vpack.c.b16 %v1976, %v1975
      %v1986 = vsel %vm1337, %v1938, 0
      %v1989 = vsel %vm1337, %v1939, 0
      %v1992 = vsel %vm1337, %v1940, 0
      %v1995 = vsel %vm1337, %v1941, 0
      %v1998 = vsel %vm1337, %v1942, 0
      %v2001 = vsel %vm1337, %v1943, 0
      %v2004 = vsel %vm1337, %v1944, 0
      %v2007 = vsel %vm1337, %v1945, 0
      %v2010 = vsel %vm1337, %v1946, 0
      %v2013 = vsel %vm1337, %v1947, 0
      %v2016 = vsel %vm1337, %v1948, 0
      %v2019 = vsel %vm1337, %v1949, 0
      %v2022 = vsel %vm1337, %v1950, 0
      %v2025 = vsel %vm1337, %v1951, 0
      %v2028 = vsel %vm1337, %v1952, 0
      %v2031 = vsel %vm1337, %v1953, 0
      %2033 = vmatprep.subr.bf16.mxu0 0
      %2034 = vmatpush1.bf16.msra.mxu0 %v1977
      %2035 = vmatprep.subr.bf16.mxu0 0
      %2036 = vmatpush1.bf16.msra.mxu0 %v1978
      %2037 = vmatprep.subr.bf16.mxu0 0
      %2038 = vmatpush1.bf16.msra.mxu0 %v1979
      %2039 = vmatprep.subr.bf16.mxu0 0
      %2040 = vmatpush1.bf16.msra.mxu0 %v1980
      %2041 = vmatprep.subr.bf16.mxu0 0
      %2042 = vmatpush1.bf16.msra.mxu0 0
      %2043 = vmatprep.subr.bf16.mxu0 0
      %2044 = vmatpush1.bf16.msra.mxu0 0
      %2045 = vmatprep.subr.bf16.mxu0 0
      %2046 = vmatpush1.bf16.msra.mxu0 0
      %2047 = vmatprep.subr.bf16.mxu0 0
      %2048 = vmatpush1.bf16.msra.mxu0 0
      %2049 = vmatprep.subr.bf16.mxu0 0
      %2050 = vmatpush1.bf16.msra.mxu0 0
      %2051 = vmatprep.subr.bf16.mxu0 0
      %2052 = vmatpush1.bf16.msra.mxu0 0
      %2053 = vmatprep.subr.bf16.mxu0 0
      %2054 = vmatpush1.bf16.msra.mxu0 0
      %2055 = vmatprep.subr.bf16.mxu0 0
      %2056 = vmatpush1.bf16.msra.mxu0 0
      %2057 = vmatprep.subr.bf16.mxu0 0
      %2058 = vmatpush1.bf16.msra.mxu0 0
      %2059 = vmatprep.subr.bf16.mxu0 0
      %2060 = vmatpush1.bf16.msra.mxu0 0
      %2061 = vmatprep.subr.bf16.mxu0 0
      %2062 = vmatpush1.bf16.msra.mxu0 0
      %2063 = vmatprep.subr.bf16.mxu0 0
      %2064 = vmatpush1.bf16.msra.mxu0 0
      %2065 = vmatprep.mubr.bf16.mxu0 0
      %2066 = vmatmul.mubr.bf16.gmra.mrb[0].mxu0 %v1986
      %v2067 = vpop.f32.mrb[0].mxu0
      %v2068 = vadd.f32 %v1959, %v2067
      %v2069 = vpop.f32.mrb[0].mxu0
      %v2070 = vpop.f32.mrb[0].mxu0
      %v2071 = vadd.f32 %v1959, %v2070
      %v2072 = vpop.f32.mrb[0].mxu0
      %2073 = vmatprep.mubr.bf16.mxu0 0
      %2074 = vmatmul.mubr.bf16.gmra.mrb[0].mxu0 %v1989
      %v2075 = vpop.f32.mrb[0].mxu0
      %v2076 = vadd.f32 %v1959, %v2075
      %v2077 = vpop.f32.mrb[0].mxu0
      %v2078 = vpop.f32.mrb[0].mxu0
      %v2079 = vadd.f32 %v1959, %v2078
      %v2080 = vpop.f32.mrb[0].mxu0
      %2081 = vmatprep.mubr.bf16.mxu0 0
      %2082 = vmatmul.mubr.bf16.gmra.mrb[0].mxu0 %v1992
      %v2083 = vpop.f32.mrb[0].mxu0
      %v2084 = vadd.f32 %v1959, %v2083
      %v2085 = vpop.f32.mrb[0].mxu0
      %v2086 = vpop.f32.mrb[0].mxu0
      %v2087 = vadd.f32 %v1959, %v2086
      %v2088 = vpop.f32.mrb[0].mxu0
      %2089 = vmatprep.mubr.bf16.mxu0 0
      %2090 = vmatmul.mubr.bf16.gmra.mrb[0].mxu0 %v1995
      %v2091 = vpop.f32.mrb[0].mxu0
      %v2092 = vadd.f32 %v1959, %v2091
      %v2093 = vpop.f32.mrb[0].mxu0
      %v2094 = vpop.f32.mrb[0].mxu0
      %v2095 = vadd.f32 %v1959, %v2094
      %v2096 = vpop.f32.mrb[0].mxu0
      %2097 = vmatprep.mubr.bf16.mxu0 0
      %2098 = vmatmul.mubr.bf16.gmra.mrb[0].mxu0 %v1998
      %v2099 = vpop.f32.mrb[0].mxu0
      %v2100 = vadd.f32 %v1959, %v2099
      %v2101 = vpop.f32.mrb[0].mxu0
      %v2102 = vpop.f32.mrb[0].mxu0
      %v2103 = vadd.f32 %v1959, %v2102
      %v2104 = vpop.f32.mrb[0].mxu0
      %2105 = vmatprep.mubr.bf16.mxu0 0
      %2106 = vmatmul.mubr.bf16.gmra.mrb[0].mxu0 %v2001
      %v2107 = vpop.f32.mrb[0].mxu0
      %v2108 = vadd.f32 %v1959, %v2107
      %v2109 = vpop.f32.mrb[0].mxu0
      %v2110 = vpop.f32.mrb[0].mxu0
      %v2111 = vadd.f32 %v1959, %v2110
      %v2112 = vpop.f32.mrb[0].mxu0
      %2113 = vmatprep.mubr.bf16.mxu0 0
      %2114 = vmatmul.mubr.bf16.gmra.mrb[0].mxu0 %v2004
      %v2115 = vpop.f32.mrb[0].mxu0
      %v2116 = vadd.f32 %v1959, %v2115
      %v2117 = vpop.f32.mrb[0].mxu0
      %v2118 = vpop.f32.mrb[0].mxu0
      %v2119 = vadd.f32 %v1959, %v2118
      %v2120 = vpop.f32.mrb[0].mxu0
      %2121 = vmatprep.mubr.bf16.mxu0 0
      %2122 = vmatmul.mubr.bf16.gmra.mrb[0].mxu0 %v2007
      %v2123 = vpop.f32.mrb[0].mxu0
      %v2124 = vadd.f32 %v1959, %v2123
      %v2125 = vpop.f32.mrb[0].mxu0
      %v2126 = vpop.f32.mrb[0].mxu0
      %v2127 = vadd.f32 %v1959, %v2126
      %v2128 = vpop.f32.mrb[0].mxu0
      %2129 = vmatprep.mubr.bf16.mxu0 0
      %2130 = vmatmul.mubr.bf16.gmra.mrb[0].mxu0 %v2010
      %v2131 = vpop.f32.mrb[0].mxu0
      %v2132 = vadd.f32 %v1959, %v2131
      %v2133 = vpop.f32.mrb[0].mxu0
      %v2134 = vpop.f32.mrb[0].mxu0
      %v2135 = vadd.f32 %v1959, %v2134
      %v2136 = vpop.f32.mrb[0].mxu0
      %2137 = vmatprep.mubr.bf16.mxu0 0
      %2138 = vmatmul.mubr.bf16.gmra.mrb[0].mxu0 %v2013
      %v2139 = vpop.f32.mrb[0].mxu0
      %v2140 = vadd.f32 %v1959, %v2139
      %v2141 = vpop.f32.mrb[0].mxu0
      %v2142 = vpop.f32.mrb[0].mxu0
      %v2143 = vadd.f32 %v1959, %v2142
      %v2144 = vpop.f32.mrb[0].mxu0
      %2145 = vmatprep.mubr.bf16.mxu0 0
      %2146 = vmatmul.mubr.bf16.gmra.mrb[0].mxu0 %v2016
      %v2147 = vpop.f32.mrb[0].mxu0
      %v2148 = vadd.f32 %v1959, %v2147
      %v2149 = vpop.f32.mrb[0].mxu0
      %v2150 = vpop.f32.mrb[0].mxu0
      %v2151 = vadd.f32 %v1959, %v2150
      %v2152 = vpop.f32.mrb[0].mxu0
      %2153 = vmatprep.mubr.bf16.mxu0 0
      %2154 = vmatmul.mubr.bf16.gmra.mrb[0].mxu0 %v2019
      %v2155 = vpop.f32.mrb[0].mxu0
      %v2156 = vadd.f32 %v1959, %v2155
      %v2157 = vpop.f32.mrb[0].mxu0
      %v2158 = vpop.f32.mrb[0].mxu0
      %v2159 = vadd.f32 %v1959, %v2158
      %v2160 = vpop.f32.mrb[0].mxu0
      %2161 = vmatprep.mubr.bf16.mxu0 0
      %2162 = vmatmul.mubr.bf16.gmra.mrb[0].mxu0 %v2022
      %v2163 = vpop.f32.mrb[0].mxu0
      %v2164 = vadd.f32 %v1959, %v2163
      %v2165 = vpop.f32.mrb[0].mxu0
      %v2166 = vpop.f32.mrb[0].mxu0
      %v2167 = vadd.f32 %v1959, %v2166
      %v2168 = vpop.f32.mrb[0].mxu0
      %2169 = vmatprep.mubr.bf16.mxu0 0
      %2170 = vmatmul.mubr.bf16.gmra.mrb[0].mxu0 %v2025
      %v2171 = vpop.f32.mrb[0].mxu0
      %v2172 = vadd.f32 %v1959, %v2171
      %v2173 = vpop.f32.mrb[0].mxu0
      %v2174 = vpop.f32.mrb[0].mxu0
      %v2175 = vadd.f32 %v1959, %v2174
      %v2176 = vpop.f32.mrb[0].mxu0
      %2177 = vmatprep.mubr.bf16.mxu0 0
      %2178 = vmatmul.mubr.bf16.gmra.mrb[0].mxu0 %v2028
      %v2179 = vpop.f32.mrb[0].mxu0
      %v2180 = vadd.f32 %v1959, %v2179
      %v2181 = vpop.f32.mrb[0].mxu0
      %v2182 = vpop.f32.mrb[0].mxu0
      %v2183 = vadd.f32 %v1959, %v2182
      %v2184 = vpop.f32.mrb[0].mxu0
      %2185 = vmatprep.mubr.bf16.mxu0 0
      %2186 = vmatmul.mubr.bf16.gmra.mrb[0].mxu0 %v2031
      %v2187 = vpop.f32.mrb[0].mxu0
      %v2188 = vadd.f32 %v1959, %v2187
      %v2189 = vpop.f32.mrb[0].mxu0
      %v2190 = vpop.f32.mrb[0].mxu0
      %v2191 = vadd.f32 %v1959, %v2190
      %v2192 = vpop.f32.mrb[0].mxu0
      %2193 = vdwg.mxu0
      %v2194 = vld [vmem:[%s13] sm:$0xf]
      %v2195 = vld [vmem:[%s13 + $0x4] sm:$0xf]
      %v2196 = vld [vmem:[%s13 + $0x8] sm:$0xf]
      %v2197 = vld [vmem:[%s13 + $0xc] sm:$0xf]
      %v2198 = vpack.c.bf16 %v679, %v678
      %v2199 = vpack.c.bf16 %v681, %v680
      %v2200 = vpack.c.bf16 %v683, %v682
      %v2201 = vpack.c.bf16 %v685, %v684
      %v2202 = vpack.c.bf16 %v687, %v686
      %v2203 = vpack.c.bf16 %v689, %v688
      %v2204 = vpack.c.bf16 %v691, %v690
      %v2205 = vpack.c.bf16 %v693, %v692
      %v2206 = vpack.c.bf16 %v695, %v694
      %v2207 = vpack.c.bf16 %v697, %v696
      %v2208 = vpack.c.bf16 %v699, %v698
      %v2209 = vpack.c.bf16 %v701, %v700
      %v2210 = vpack.c.bf16 %v703, %v702
      %v2211 = vpack.c.bf16 %v705, %v704
      %v2212 = vpack.c.bf16 %v707, %v706
      %v2213 = vpack.c.bf16 %v709, %v708
      %v2214 = vld [vmem:[%s14] sm:$0xf]
      %v2215 = vld [vmem:[%s14 + $0x4] sm:$0xf]
      %v2216 = vld [vmem:[%s14 + $0x8] sm:$0xf]
      %v2217 = vld [vmem:[%s14 + $0xc] sm:$0xf]
      %v2218 = vpack.c.bf16 %v2071, %v2068
      %v2219 = vpack.c.bf16 %v2079, %v2076
      %v2220 = vpack.c.bf16 %v2087, %v2084
      %v2221 = vpack.c.bf16 %v2095, %v2092
      %v2222 = vpack.c.bf16 %v2103, %v2100
      %v2223 = vpack.c.bf16 %v2111, %v2108
      %v2224 = vpack.c.bf16 %v2119, %v2116
      %v2225 = vpack.c.bf16 %v2127, %v2124
      %v2226 = vpack.c.bf16 %v2135, %v2132
      %v2227 = vpack.c.bf16 %v2143, %v2140
      %v2228 = vpack.c.bf16 %v2151, %v2148
      %v2229 = vpack.c.bf16 %v2159, %v2156
      %v2230 = vpack.c.bf16 %v2167, %v2164
      %v2231 = vpack.c.bf16 %v2175, %v2172
      %v2232 = vpack.c.bf16 %v2183, %v2180
      %v2233 = vpack.c.bf16 %v2191, %v2188
      %v2238 = vunpack.c.l.b16 %v2214
      %v2239 = vunpack.c.l.b16 %v2215
      %v2240 = vunpack.c.l.b16 %v2216
      %v2241 = vunpack.c.l.b16 %v2217
      %v2242 = vpack.c.b16 %v2239, %v2238
      %v2243 = vpack.c.b16 %v2241, %v2240
      %v2247 = vsel %vm826, %v2218, 0
      %v2250 = vsel %vm826, %v2219, 0
      %v2253 = vsel %vm826, %v2220, 0
      %v2256 = vsel %vm826, %v2221, 0
      %v2259 = vsel %vm826, %v2222, 0
      %v2262 = vsel %vm826, %v2223, 0
      %v2265 = vsel %vm826, %v2224, 0
      %v2268 = vsel %vm826, %v2225, 0
      %v2271 = vsel %vm826, %v2226, 0
      %v2274 = vsel %vm826, %v2227, 0
      %v2277 = vsel %vm826, %v2228, 0
      %v2280 = vsel %vm826, %v2229, 0
      %v2283 = vsel %vm826, %v2230, 0
      %v2286 = vsel %vm826, %v2231, 0
      %v2289 = vsel %vm826, %v2232, 0
      %v2292 = vsel %vm826, %v2233, 0
      %2294 = vmatprep.subr.bf16.mxu0 0
      %2295 = vmatpush1.bf16.msra.mxu0 %v2242
      %2296 = vmatprep.subr.bf16.mxu0 0
      %2297 = vmatpush1.bf16.msra.mxu0 %v2243
      %2298 = vmatprep.subr.bf16.mxu0 0
      %2299 = vmatpush1.bf16.msra.mxu0 0
      %2300 = vmatprep.subr.bf16.mxu0 0
      %2301 = vmatpush1.bf16.msra.mxu0 0
      %2302 = vmatprep.subr.bf16.mxu0 0
      %2303 = vmatpush1.bf16.msra.mxu0 0
      %2304 = vmatprep.subr.bf16.mxu0 0
      %2305 = vmatpush1.bf16.msra.mxu0 0
      %2306 = vmatprep.subr.bf16.mxu0 0
      %2307 = vmatpush1.bf16.msra.mxu0 0
      %2308 = vmatprep.subr.bf16.mxu0 0
      %2309 = vmatpush1.bf16.msra.mxu0 0
      %2310 = vmatprep.subr.bf16.mxu0 0
      %2311 = vmatpush1.bf16.msra.mxu0 0
      %2312 = vmatprep.subr.bf16.mxu0 0
      %2313 = vmatpush1.bf16.msra.mxu0 0
      %2314 = vmatprep.subr.bf16.mxu0 0
      %2315 = vmatpush1.bf16.msra.mxu0 0
      %2316 = vmatprep.subr.bf16.mxu0 0
      %2317 = vmatpush1.bf16.msra.mxu0 0
      %2318 = vmatprep.subr.bf16.mxu0 0
      %2319 = vmatpush1.bf16.msra.mxu0 0
      %2320 = vmatprep.subr.bf16.mxu0 0
      %2321 = vmatpush1.bf16.msra.mxu0 0
      %2322 = vmatprep.subr.bf16.mxu0 0
      %2323 = vmatpush1.bf16.msra.mxu0 0
      %2324 = vmatprep.subr.bf16.mxu0 0
      %2325 = vmatpush1.bf16.msra.mxu0 0
      %2326 = vmatprep.mubr.bf16.mxu0 0
      %2327 = vmatmul.mubr.bf16.gmra.mrb[0].mxu0 %v2247
      %v2328 = vpop.f32.mrb[0].mxu0
      %v2329 = vadd.f32 0.0, %v2328
      %v2330 = vpop.f32.mrb[0].mxu0
      %v2331 = vpop.f32.mrb[0].mxu0
      %v2332 = vadd.f32 0.0, %v2331
      %v2333 = vpop.f32.mrb[0].mxu0
      %2334 = vmatprep.mubr.bf16.mxu0 0
      %2335 = vmatmul.mubr.bf16.gmra.mrb[0].mxu0 %v2250
      %v2336 = vpop.f32.mrb[0].mxu0
      %v2337 = vadd.f32 0.0, %v2336
      %v2338 = vpop.f32.mrb[0].mxu0
      %v2339 = vpop.f32.mrb[0].mxu0
      %v2340 = vadd.f32 0.0, %v2339
      %v2341 = vpop.f32.mrb[0].mxu0
      %2342 = vmatprep.mubr.bf16.mxu0 0
      %2343 = vmatmul.mubr.bf16.gmra.mrb[0].mxu0 %v2253
      %v2344 = vpop.f32.mrb[0].mxu0
      %v2345 = vadd.f32 0.0, %v2344
      %v2346 = vpop.f32.mrb[0].mxu0
      %v2347 = vpop.f32.mrb[0].mxu0
      %v2348 = vadd.f32 0.0, %v2347
      %v2349 = vpop.f32.mrb[0].mxu0
      %2350 = vmatprep.mubr.bf16.mxu0 0
      %2351 = vmatmul.mubr.bf16.gmra.mrb[0].mxu0 %v2256
      %v2352 = vpop.f32.mrb[0].mxu0
      %v2353 = vadd.f32 0.0, %v2352
      %v2354 = vpop.f32.mrb[0].mxu0
      %v2355 = vpop.f32.mrb[0].mxu0
      %v2356 = vadd.f32 0.0, %v2355
      %v2357 = vpop.f32.mrb[0].mxu0
      %2358 = vmatprep.mubr.bf16.mxu0 0
      %2359 = vmatmul.mubr.bf16.gmra.mrb[0].mxu0 %v2259
      %v2360 = vpop.f32.mrb[0].mxu0
      %v2361 = vadd.f32 0.0, %v2360
      %v2362 = vpop.f32.mrb[0].mxu0
      %v2363 = vpop.f32.mrb[0].mxu0
      %v2364 = vadd.f32 0.0, %v2363
      %v2365 = vpop.f32.mrb[0].mxu0
      %2366 = vmatprep.mubr.bf16.mxu0 0
      %2367 = vmatmul.mubr.bf16.gmra.mrb[0].mxu0 %v2262
      %v2368 = vpop.f32.mrb[0].mxu0
      %v2369 = vadd.f32 0.0, %v2368
      %v2370 = vpop.f32.mrb[0].mxu0
      %v2371 = vpop.f32.mrb[0].mxu0
      %v2372 = vadd.f32 0.0, %v2371
      %v2373 = vpop.f32.mrb[0].mxu0
      %2374 = vmatprep.mubr.bf16.mxu0 0
      %2375 = vmatmul.mubr.bf16.gmra.mrb[0].mxu0 %v2265
      %v2376 = vpop.f32.mrb[0].mxu0
      %v2377 = vadd.f32 0.0, %v2376
      %v2378 = vpop.f32.mrb[0].mxu0
      %v2379 = vpop.f32.mrb[0].mxu0
      %v2380 = vadd.f32 0.0, %v2379
      %v2381 = vpop.f32.mrb[0].mxu0
      %2382 = vmatprep.mubr.bf16.mxu0 0
      %2383 = vmatmul.mubr.bf16.gmra.mrb[0].mxu0 %v2268
      %v2384 = vpop.f32.mrb[0].mxu0
      %v2385 = vadd.f32 0.0, %v2384
      %v2386 = vpop.f32.mrb[0].mxu0
      %v2387 = vpop.f32.mrb[0].mxu0
      %v2388 = vadd.f32 0.0, %v2387
      %v2389 = vpop.f32.mrb[0].mxu0
      %2390 = vmatprep.mubr.bf16.mxu0 0
      %2391 = vmatmul.mubr.bf16.gmra.mrb[0].mxu0 %v2271
      %v2392 = vpop.f32.mrb[0].mxu0
      %v2393 = vadd.f32 0.0, %v2392
      %v2394 = vpop.f32.mrb[0].mxu0
      %v2395 = vpop.f32.mrb[0].mxu0
      %v2396 = vadd.f32 0.0, %v2395
      %v2397 = vpop.f32.mrb[0].mxu0
      %2398 = vmatprep.mubr.bf16.mxu0 0
      %2399 = vmatmul.mubr.bf16.gmra.mrb[0].mxu0 %v2274
      %v2400 = vpop.f32.mrb[0].mxu0
      %v2401 = vadd.f32 0.0, %v2400
      %v2402 = vpop.f32.mrb[0].mxu0
      %v2403 = vpop.f32.mrb[0].mxu0
      %v2404 = vadd.f32 0.0, %v2403
      %v2405 = vpop.f32.mrb[0].mxu0
      %2406 = vmatprep.mubr.bf16.mxu0 0
      %2407 = vmatmul.mubr.bf16.gmra.mrb[0].mxu0 %v2277
      %v2408 = vpop.f32.mrb[0].mxu0
      %v2409 = vadd.f32 0.0, %v2408
      %v2410 = vpop.f32.mrb[0].mxu0
      %v2411 = vpop.f32.mrb[0].mxu0
      %v2412 = vadd.f32 0.0, %v2411
      %v2413 = vpop.f32.mrb[0].mxu0
      %2414 = vmatprep.mubr.bf16.mxu0 0
      %2415 = vmatmul.mubr.bf16.gmra.mrb[0].mxu0 %v2280
      %v2416 = vpop.f32.mrb[0].mxu0
      %v2417 = vadd.f32 0.0, %v2416
      %v2418 = vpop.f32.mrb[0].mxu0
      %v2419 = vpop.f32.mrb[0].mxu0
      %v2420 = vadd.f32 0.0, %v2419
      %v2421 = vpop.f32.mrb[0].mxu0
      %2422 = vmatprep.mubr.bf16.mxu0 0
      %2423 = vmatmul.mubr.bf16.gmra.mrb[0].mxu0 %v2283
      %v2424 = vpop.f32.mrb[0].mxu0
      %v2425 = vadd.f32 0.0, %v2424
      %v2426 = vpop.f32.mrb[0].mxu0
      %v2427 = vpop.f32.mrb[0].mxu0
      %v2428 = vadd.f32 0.0, %v2427
      %v2429 = vpop.f32.mrb[0].mxu0
      %2430 = vmatprep.mubr.bf16.mxu0 0
      %2431 = vmatmul.mubr.bf16.gmra.mrb[0].mxu0 %v2286
      %v2432 = vpop.f32.mrb[0].mxu0
      %v2433 = vadd.f32 0.0, %v2432
      %v2434 = vpop.f32.mrb[0].mxu0
      %v2435 = vpop.f32.mrb[0].mxu0
      %v2436 = vadd.f32 0.0, %v2435
      %v2437 = vpop.f32.mrb[0].mxu0
      %2438 = vmatprep.mubr.bf16.mxu0 0
      %2439 = vmatmul.mubr.bf16.gmra.mrb[0].mxu0 %v2289
      %v2440 = vpop.f32.mrb[0].mxu0
      %v2441 = vadd.f32 0.0, %v2440
      %v2442 = vpop.f32.mrb[0].mxu0
      %v2443 = vpop.f32.mrb[0].mxu0
      %v2444 = vadd.f32 0.0, %v2443
      %v2445 = vpop.f32.mrb[0].mxu0
      %2446 = vmatprep.mubr.bf16.mxu0 0
      %2447 = vmatmul.mubr.bf16.gmra.mrb[0].mxu0 %v2292
      %v2448 = vpop.f32.mrb[0].mxu0
      %v2449 = vadd.f32 0.0, %v2448
      %v2450 = vpop.f32.mrb[0].mxu0
      %v2451 = vpop.f32.mrb[0].mxu0
      %v2452 = vadd.f32 0.0, %v2451
      %v2453 = vpop.f32.mrb[0].mxu0
      %2454 = vdwg.mxu0
      %v2459 = vunpack.c.l.b16 %v2194
      %v2460 = vunpack.c.l.b16 %v2195
      %v2461 = vunpack.c.l.b16 %v2196
      %v2462 = vunpack.c.l.b16 %v2197
      %v2463 = vpack.c.b16 %v2460, %v2459
      %v2464 = vpack.c.b16 %v2462, %v2461
      %v2468 = vsel %vm826, %v2198, 0
      %v2471 = vsel %vm826, %v2199, 0
      %v2474 = vsel %vm826, %v2200, 0
      %v2477 = vsel %vm826, %v2201, 0
      %v2480 = vsel %vm826, %v2202, 0
      %v2483 = vsel %vm826, %v2203, 0
      %v2486 = vsel %vm826, %v2204, 0
      %v2489 = vsel %vm826, %v2205, 0
      %v2492 = vsel %vm826, %v2206, 0
      %v2495 = vsel %vm826, %v2207, 0
      %v2498 = vsel %vm826, %v2208, 0
      %v2501 = vsel %vm826, %v2209, 0
      %v2504 = vsel %vm826, %v2210, 0
      %v2507 = vsel %vm826, %v2211, 0
      %v2510 = vsel %vm826, %v2212, 0
      %v2513 = vsel %vm826, %v2213, 0
      %2515 = vmatprep.subr.bf16.mxu0 0
      %2516 = vmatpush1.bf16.msra.mxu0 %v2463
      %2517 = vmatprep.subr.bf16.mxu0 0
      %2518 = vmatpush1.bf16.msra.mxu0 %v2464
      %2519 = vmatprep.subr.bf16.mxu0 0
      %2520 = vmatpush1.bf16.msra.mxu0 0
      %2521 = vmatprep.subr.bf16.mxu0 0
      %2522 = vmatpush1.bf16.msra.mxu0 0
      %2523 = vmatprep.subr.bf16.mxu0 0
      %2524 = vmatpush1.bf16.msra.mxu0 0
      %2525 = vmatprep.subr.bf16.mxu0 0
      %2526 = vmatpush1.bf16.msra.mxu0 0
      %2527 = vmatprep.subr.bf16.mxu0 0
      %2528 = vmatpush1.bf16.msra.mxu0 0
      %2529 = vmatprep.subr.bf16.mxu0 0
      %2530 = vmatpush1.bf16.msra.mxu0 0
      %2531 = vmatprep.subr.bf16.mxu0 0
      %2532 = vmatpush1.bf16.msra.mxu0 0
      %2533 = vmatprep.subr.bf16.mxu0 0
      %2534 = vmatpush1.bf16.msra.mxu0 0
      %2535 = vmatprep.subr.bf16.mxu0 0
      %2536 = vmatpush1.bf16.msra.mxu0 0
      %2537 = vmatprep.subr.bf16.mxu0 0
      %2538 = vmatpush1.bf16.msra.mxu0 0
      %2539 = vmatprep.subr.bf16.mxu0 0
      %2540 = vmatpush1.bf16.msra.mxu0 0
      %2541 = vmatprep.subr.bf16.mxu0 0
      %2542 = vmatpush1.bf16.msra.mxu0 0
      %2543 = vmatprep.subr.bf16.mxu0 0
      %2544 = vmatpush1.bf16.msra.mxu0 0
      %2545 = vmatprep.subr.bf16.mxu0 0
      %2546 = vmatpush1.bf16.msra.mxu0 0
      %2547 = vmatprep.mubr.bf16.mxu0 0
      %2548 = vmatmul.mubr.bf16.gmra.mrb[0].mxu0 %v2468
      %v2549 = vpop.f32.mrb[0].mxu0
      %v2550 = vadd.f32 %v2329, %v2549
      %v2551 = vpop.f32.mrb[0].mxu0
      %v2552 = vpop.f32.mrb[0].mxu0
      %v2553 = vadd.f32 %v2332, %v2552
      %v2554 = vpop.f32.mrb[0].mxu0
      %2555 = vmatprep.mubr.bf16.mxu0 0
      %2556 = vmatmul.mubr.bf16.gmra.mrb[0].mxu0 %v2471
      %v2557 = vpop.f32.mrb[0].mxu0
      %v2558 = vadd.f32 %v2337, %v2557
      %v2559 = vpop.f32.mrb[0].mxu0
      %v2560 = vpop.f32.mrb[0].mxu0
      %v2561 = vadd.f32 %v2340, %v2560
      %v2562 = vpop.f32.mrb[0].mxu0
      %2563 = vmatprep.mubr.bf16.mxu0 0
      %2564 = vmatmul.mubr.bf16.gmra.mrb[0].mxu0 %v2474
      %v2565 = vpop.f32.mrb[0].mxu0
      %v2566 = vadd.f32 %v2345, %v2565
      %v2567 = vpop.f32.mrb[0].mxu0
      %v2568 = vpop.f32.mrb[0].mxu0
      %v2569 = vadd.f32 %v2348, %v2568
      %v2570 = vpop.f32.mrb[0].mxu0
      %2571 = vmatprep.mubr.bf16.mxu0 0
      %2572 = vmatmul.mubr.bf16.gmra.mrb[0].mxu0 %v2477
      %v2573 = vpop.f32.mrb[0].mxu0
      %v2574 = vadd.f32 %v2353, %v2573
      %v2575 = vpop.f32.mrb[0].mxu0
      %v2576 = vpop.f32.mrb[0].mxu0
      %v2577 = vadd.f32 %v2356, %v2576
      %v2578 = vpop.f32.mrb[0].mxu0
      %2579 = vmatprep.mubr.bf16.mxu0 0
      %2580 = vmatmul.mubr.bf16.gmra.mrb[0].mxu0 %v2480
      %v2581 = vpop.f32.mrb[0].mxu0
      %v2582 = vadd.f32 %v2361, %v2581
      %v2583 = vpop.f32.mrb[0].mxu0
      %v2584 = vpop.f32.mrb[0].mxu0
      %v2585 = vadd.f32 %v2364, %v2584
      %v2586 = vpop.f32.mrb[0].mxu0
      %2587 = vmatprep.mubr.bf16.mxu0 0
      %2588 = vmatmul.mubr.bf16.gmra.mrb[0].mxu0 %v2483
      %v2589 = vpop.f32.mrb[0].mxu0
      %v2590 = vadd.f32 %v2369, %v2589
      %v2591 = vpop.f32.mrb[0].mxu0
      %v2592 = vpop.f32.mrb[0].mxu0
      %v2593 = vadd.f32 %v2372, %v2592
      %v2594 = vpop.f32.mrb[0].mxu0
      %2595 = vmatprep.mubr.bf16.mxu0 0
      %2596 = vmatmul.mubr.bf16.gmra.mrb[0].mxu0 %v2486
      %v2597 = vpop.f32.mrb[0].mxu0
      %v2598 = vadd.f32 %v2377, %v2597
      %v2599 = vpop.f32.mrb[0].mxu0
      %v2600 = vpop.f32.mrb[0].mxu0
      %v2601 = vadd.f32 %v2380, %v2600
      %v2602 = vpop.f32.mrb[0].mxu0
      %2603 = vmatprep.mubr.bf16.mxu0 0
      %2604 = vmatmul.mubr.bf16.gmra.mrb[0].mxu0 %v2489
      %v2605 = vpop.f32.mrb[0].mxu0
      %v2606 = vadd.f32 %v2385, %v2605
      %v2607 = vpop.f32.mrb[0].mxu0
      %v2608 = vpop.f32.mrb[0].mxu0
      %v2609 = vadd.f32 %v2388, %v2608
      %v2610 = vpop.f32.mrb[0].mxu0
      %2611 = vmatprep.mubr.bf16.mxu0 0
      %2612 = vmatmul.mubr.bf16.gmra.mrb[0].mxu0 %v2492
      %v2613 = vpop.f32.mrb[0].mxu0
      %v2614 = vadd.f32 %v2393, %v2613
      %v2615 = vpop.f32.mrb[0].mxu0
      %v2616 = vpop.f32.mrb[0].mxu0
      %v2617 = vadd.f32 %v2396, %v2616
      %v2618 = vpop.f32.mrb[0].mxu0
      %2619 = vmatprep.mubr.bf16.mxu0 0
      %2620 = vmatmul.mubr.bf16.gmra.mrb[0].mxu0 %v2495
      %v2621 = vpop.f32.mrb[0].mxu0
      %v2622 = vadd.f32 %v2401, %v2621
      %v2623 = vpop.f32.mrb[0].mxu0
      %v2624 = vpop.f32.mrb[0].mxu0
      %v2625 = vadd.f32 %v2404, %v2624
      %v2626 = vpop.f32.mrb[0].mxu0
      %2627 = vmatprep.mubr.bf16.mxu0 0
      %2628 = vmatmul.mubr.bf16.gmra.mrb[0].mxu0 %v2498
      %v2629 = vpop.f32.mrb[0].mxu0
      %v2630 = vadd.f32 %v2409, %v2629
      %v2631 = vpop.f32.mrb[0].mxu0
      %v2632 = vpop.f32.mrb[0].mxu0
      %v2633 = vadd.f32 %v2412, %v2632
      %v2634 = vpop.f32.mrb[0].mxu0
      %2635 = vmatprep.mubr.bf16.mxu0 0
      %2636 = vmatmul.mubr.bf16.gmra.mrb[0].mxu0 %v2501
      %v2637 = vpop.f32.mrb[0].mxu0
      %v2638 = vadd.f32 %v2417, %v2637
      %v2639 = vpop.f32.mrb[0].mxu0
      %v2640 = vpop.f32.mrb[0].mxu0
      %v2641 = vadd.f32 %v2420, %v2640
      %v2642 = vpop.f32.mrb[0].mxu0
      %2643 = vmatprep.mubr.bf16.mxu0 0
      %2644 = vmatmul.mubr.bf16.gmra.mrb[0].mxu0 %v2504
      %v2645 = vpop.f32.mrb[0].mxu0
      %v2646 = vadd.f32 %v2425, %v2645
      %v2647 = vpop.f32.mrb[0].mxu0
      %v2648 = vpop.f32.mrb[0].mxu0
      %v2649 = vadd.f32 %v2428, %v2648
      %v2650 = vpop.f32.mrb[0].mxu0
      %2651 = vmatprep.mubr.bf16.mxu0 0
      %2652 = vmatmul.mubr.bf16.gmra.mrb[0].mxu0 %v2507
      %v2653 = vpop.f32.mrb[0].mxu0
      %v2654 = vadd.f32 %v2433, %v2653
      %v2655 = vpop.f32.mrb[0].mxu0
      %v2656 = vpop.f32.mrb[0].mxu0
      %v2657 = vadd.f32 %v2436, %v2656
      %v2658 = vpop.f32.mrb[0].mxu0
      %2659 = vmatprep.mubr.bf16.mxu0 0
      %2660 = vmatmul.mubr.bf16.gmra.mrb[0].mxu0 %v2510
      %v2661 = vpop.f32.mrb[0].mxu0
      %v2662 = vadd.f32 %v2441, %v2661
      %v2663 = vpop.f32.mrb[0].mxu0
      %v2664 = vpop.f32.mrb[0].mxu0
      %v2665 = vadd.f32 %v2444, %v2664
      %v2666 = vpop.f32.mrb[0].mxu0
      %2667 = vmatprep.mubr.bf16.mxu0 0
      %2668 = vmatmul.mubr.bf16.gmra.mrb[0].mxu0 %v2513
      %v2669 = vpop.f32.mrb[0].mxu0
      %v2670 = vadd.f32 %v2449, %v2669
      %v2671 = vpop.f32.mrb[0].mxu0
      %v2672 = vpop.f32.mrb[0].mxu0
      %v2673 = vadd.f32 %v2452, %v2672
      %v2674 = vpop.f32.mrb[0].mxu0
      %2675 = vdwg.mxu0
      %v2676 = vld [vmem:[%s15] sm:$0x1]
      %v2678 = vlaneseq
      %v2679 = vshrl.u32 %v2678, 7
      %v2680 = vsub.s32 0, %v2679
      %v2681 = vrot.slane %v2676, %v2680
      %v2683 = vadd.f32 %v2550, %v2681
      %v2684 = vadd.f32 %v2553, %v2681
      %v2685 = vadd.f32 %v2558, %v2681
      %v2686 = vadd.f32 %v2561, %v2681
      %v2687 = vadd.f32 %v2566, %v2681
      %v2688 = vadd.f32 %v2569, %v2681
      %v2689 = vadd.f32 %v2574, %v2681
      %v2690 = vadd.f32 %v2577, %v2681
      %v2691 = vadd.f32 %v2582, %v2681
      %v2692 = vadd.f32 %v2585, %v2681
      %v2693 = vadd.f32 %v2590, %v2681
      %v2694 = vadd.f32 %v2593, %v2681
      %v2695 = vadd.f32 %v2598, %v2681
      %v2696 = vadd.f32 %v2601, %v2681
      %v2697 = vadd.f32 %v2606, %v2681
      %v2698 = vadd.f32 %v2609, %v2681
      %v2699 = vadd.f32 %v2614, %v2681
      %v2700 = vadd.f32 %v2617, %v2681
      %v2701 = vadd.f32 %v2622, %v2681
      %v2702 = vadd.f32 %v2625, %v2681
      %v2703 = vadd.f32 %v2630, %v2681
      %v2704 = vadd.f32 %v2633, %v2681
      %v2705 = vadd.f32 %v2638, %v2681
      %v2706 = vadd.f32 %v2641, %v2681
      %v2707 = vadd.f32 %v2646, %v2681
      %v2708 = vadd.f32 %v2649, %v2681
      %v2709 = vadd.f32 %v2654, %v2681
      %v2710 = vadd.f32 %v2657, %v2681
      %v2711 = vadd.f32 %v2662, %v2681
      %v2712 = vadd.f32 %v2665, %v2681
      %v2713 = vadd.f32 %v2670, %v2681
      %v2714 = vadd.f32 %v2673, %v2681
      %2715 = vst [vmem:[%s611] sm:$0xff] %v2683
      %2716 = vst [vmem:[%s611 + $0x8] sm:$0xff] %v2684
      %2717 = vst [vmem:[%s611 + $0x10] sm:$0xff] %v2685
      %2718 = vst [vmem:[%s611 + $0x18] sm:$0xff] %v2686
      %2719 = vst [vmem:[%s611 + $0x20] sm:$0xff] %v2687
      %2720 = vst [vmem:[%s611 + $0x28] sm:$0xff] %v2688
      %2721 = vst [vmem:[%s611 + $0x30] sm:$0xff] %v2689
      %2722 = vst [vmem:[%s611 + $0x38] sm:$0xff] %v2690
      %2723 = vst [vmem:[%s611 + $0x40] sm:$0xff] %v2691
      %2724 = vst [vmem:[%s611 + $0x48] sm:$0xff] %v2692
      %2725 = vst [vmem:[%s611 + $0x50] sm:$0xff] %v2693
      %2726 = vst [vmem:[%s611 + $0x58] sm:$0xff] %v2694
      %2727 = vst [vmem:[%s611 + $0x60] sm:$0xff] %v2695
      %2728 = vst [vmem:[%s611 + $0x68] sm:$0xff] %v2696
      %2729 = vst [vmem:[%s611 + $0x70] sm:$0xff] %v2697
      %2730 = vst [vmem:[%s611 + $0x78] sm:$0xff] %v2698
      %2731 = vst [vmem:[%s611 + $0x80] sm:$0xff] %v2699
      %2732 = vst [vmem:[%s611 + $0x88] sm:$0xff] %v2700
      %2733 = vst [vmem:[%s611 + $0x90] sm:$0xff] %v2701
      %2734 = vst [vmem:[%s611 + $0x98] sm:$0xff] %v2702
      %2735 = vst [vmem:[%s611 + $0xa0] sm:$0xff] %v2703
      %2736 = vst [vmem:[%s611 + $0xa8] sm:$0xff] %v2704
      %2737 = vst [vmem:[%s611 + $0xb0] sm:$0xff] %v2705
      %2738 = vst [vmem:[%s611 + $0xb8] sm:$0xff] %v2706
      %2739 = vst [vmem:[%s611 + $0xc0] sm:$0xff] %v2707
      %2740 = vst [vmem:[%s611 + $0xc8] sm:$0xff] %v2708
      %2741 = vst [vmem:[%s611 + $0xd0] sm:$0xff] %v2709
      %2742 = vst [vmem:[%s611 + $0xd8] sm:$0xff] %v2710
      %2743 = vst [vmem:[%s611 + $0xe0] sm:$0xff] %v2711
      %2744 = vst [vmem:[%s611 + $0xe8] sm:$0xff] %v2712
      %2745 = vst [vmem:[%s611 + $0xf0] sm:$0xff] %v2713
      %2746 = vst [vmem:[%s611 + $0xf8] sm:$0xff] %v2714
      %s2747 = smul.u32 32, %s27
      %p2748 = scmp.lt.s32.totalorder %s2747, 63
      %s2749 = scalar_select %p2748, %s2747, 63
      %s2750 = smul.addr %s2749, 8
      %s2751 = scalar_lea.vmem %s16, %s2750
      // Predicated region
      $region85: #{neucf_forward.1} parent=83 // pred_check
        %p2752 = pneg %p406
      $region86: #{neucf_forward.1} parent=83 // pred_check_branch
        %2754 = sbr.rel (%p2752) target = $region88
      $region87: #{neucf_forward.1} parent=83 // pred_region
        %s2755 = smul.u32 32, %s27
      $region88: #{neucf_forward.1} parent=83 // pred_fallthru
        _
    $region84: #{neucf_forward.1} parent=5 // pred_fallthru
      _
    %p2756 = scmp.le.s32.totalorder 2, %s22
    // Predicated region
    $region89: #{neucf_forward.1} parent=5 // pred_check
      %p2757 = pneg %p2756
    $region90: #{neucf_forward.1} parent=5 // pred_check_branch
      %2759 = sbr.rel (%p2757) target = $region92
    $region91: #{neucf_forward.1} parent=5 // pred_region
      %s2760 = ssub.s32 %s22, 2
      // Predicated region
      $region93: #{neucf_forward.1} parent=91 // pred_check
        %p2761 = pneg %p412
      $region94: #{neucf_forward.1} parent=91 // pred_check_branch
        %2763 = sbr.rel (%p2761) target = $region96
      $region95: #{neucf_forward.1} parent=91 // pred_region
        %s2764 = smul.u32 32, %s28
        %p2765 = scmp.lt.s32.totalorder %s2764, 63
        %s2766 = scalar_select %p2765, %s2764, 63
        %s2767 = smul.addr %s2766, 8
        %s2768 = scalar_lea.vmem %s16, %s2767
      $region96: #{neucf_forward.1} parent=91 // pred_fallthru
        _
    $region92: #{neucf_forward.1} parent=5 // pred_fallthru
      _
  $region6: #{neucf_forward.1} parent=0 // loop_footer
    %s26 = sadd.s32 1, %s22
  $region7: #{neucf_forward.1} parent=0 // loop_footer_branch
    %21 = sbr.rel target = $region3
  $region8: #{neucf_forward.1} parent=0 // loop_exit
    _

</llo_original>
